<compile_context>
chip_gen: v7x
topology: tpu7x:2x2x1
jax: 0.10.0
libtpu: 0.0.40
codegen_flags: <defaults>
</compile_context>

<pallas_src>
import functools

import jax
import jax.numpy as jnp
import numpy as np
from jax.experimental import pallas as pl
from jax.experimental.pallas import tpu as pltpu

LANE = 128
SUBLANE = 8
_NEG = -1e30


def _round_up(x, m):
    return (x + m - 1) // m * m


def attn_decoder_kernel(
    emb_ref,      # (U, Bp, Hp)   embedded word inputs for this step block
    enc_ref,      # (Bp, S, Hp)   encoder outputs, batch-major (VMEM-resident)
    init_ref,     # (3, Bp, Hp)   [h0, c0, context0] (read at grid step 0 only)
    w_rnn_ref,    # (3*Hp, 4*Hp)  fused LSTM weight, rows=[emb|ctx|h], cols=gates
    b_gate_ref,   # (1, 4*Hp)     b_ih + b_hh, per-gate 128-lane groups
    attn_w_ref,   # (Hp, Hp)      Attn('general') weight (untransposed, padded)
    w_out_ref,    # (2*Hp, Op)    fused out weight, rows=[h|ctx], vocab padded
    b_out_ref,    # (1, Op)       out bias, padded lanes = -1e30
    logp_ref,     # (U, Bp, Op)   per-step log-probs (padded vocab)
    ctx_out_ref,  # (U, Bp, Hp)   per-step context
    attn_ref,     # (U, Bp, S)    per-step attention weights
    fin_ref,      # (2, Bp, Hp)   final [h, c] (resident output, written once)
    h_s, c_s, ctx_s,              # VMEM scratch: state carried across grid steps
    *, n_valid_steps, guard_tail,
):
    Hp = h_s.shape[-1]
    U = emb_ref.shape[0]

    @pl.when(pl.program_id(0) == 0)
    def _():
        h_s[...] = init_ref[0]
        c_s[...] = init_ref[1]
        ctx_s[...] = init_ref[2]

    enc = enc_ref[...]            # (Bp, S, Hp)
    w_rnn = w_rnn_ref[...]
    b_gate = b_gate_ref[...]
    attn_w = attn_w_ref[...]
    w_out = w_out_ref[...]
    b_out = b_out_ref[...]

    h = h_s[...]
    c = c_s[...]
    ctx = ctx_s[...]
    base = pl.program_id(0) * U   # global index of the first step in this block

    for u in range(U):            # statically unrolled decode steps
        # ---- LSTM cell: one fused matmul, gates in 128-lane groups (i,f,g,o) --
        x = jnp.concatenate([emb_ref[u], ctx, h], axis=-1)          # (Bp, 3Hp)
        gates = jnp.dot(x, w_rnn, preferred_element_type=jnp.float32) + b_gate
        i_g = jax.nn.sigmoid(gates[:, 0 * Hp:1 * Hp])
        f_g = jax.nn.sigmoid(gates[:, 1 * Hp:2 * Hp])
        g_g = jnp.tanh(gates[:, 2 * Hp:3 * Hp])
        o_g = jax.nn.sigmoid(gates[:, 3 * Hp:4 * Hp])
        c_new = f_g * c + i_g * g_g
        h_new = o_g * jnp.tanh(c_new)

        # ---- attention 'general': softmax over the sequence axis -------------
        q = jnp.dot(h_new, attn_w, preferred_element_type=jnp.float32)  # (Bp,Hp)
        scores = jnp.sum(enc * q[:, None, :], axis=-1)                  # (Bp, S)
        m = jnp.max(scores, axis=-1, keepdims=True)
        e = jnp.exp(scores - m)
        w = e * pl.reciprocal(jnp.sum(e, axis=-1, keepdims=True), approx=True)
        ctx_new = jnp.sum(w[:, :, None] * enc, axis=1)                  # (Bp,Hp)

        # ---- output projection (one fused matmul) + log_softmax --------------
        y = jnp.concatenate([h_new, ctx_new], axis=-1)                  # (Bp,2Hp)
        logits = jnp.dot(y, w_out, preferred_element_type=jnp.float32) + b_out
        m2 = jnp.max(logits, axis=-1, keepdims=True)
        lse = m2 + jnp.log(jnp.sum(jnp.exp(logits - m2), axis=-1, keepdims=True))

        logp_ref[u] = logits - lse
        ctx_out_ref[u] = ctx_new
        attn_ref[u] = w

        if guard_tail:
            # Steps past T (grid padding) must not advance the carried state.
            keep = (base + u) < n_valid_steps
            h = jnp.where(keep, h_new, h)
            c = jnp.where(keep, c_new, c)
            ctx = jnp.where(keep, ctx_new, ctx)
        else:
            h, c, ctx = h_new, c_new, ctx_new

    # carry state to the next grid step; final (h, c) output block is resident.
    h_s[...] = h
    c_s[...] = c
    ctx_s[...] = ctx
    fin_ref[0] = h
    fin_ref[1] = c


def prepare_params(params, weights_dtype=jnp.float32):
    """One-time weight repacking: gate fusion, transposes, lane-group padding.

    weights_dtype=jnp.bfloat16 halves the resident VMEM for big shapes (matmul
    math still accumulates in f32); keep f32 for strict parity with PyTorch.
    """
    H = int(params["attn_w"].shape[0])
    O = int(params["out_w"].shape[0])
    Hp = _round_up(H, LANE)
    Op = _round_up(max(O, LANE), LANE)

    f32 = jnp.float32
    w_ih = jnp.asarray(params["w_ih"], f32)     # (4H, 2H), input = [emb | ctx]
    w_hh = jnp.asarray(params["w_hh"], f32)     # (4H, H)
    b_ih = jnp.asarray(params["b_ih"], f32)
    b_hh = jnp.asarray(params["b_hh"], f32)

    # Fused gate weight (3Hp, 4Hp): row blocks [emb | ctx | h], column blocks =
    # gates (i,f,g,o), each gate aligned to its own Hp lane group.  Padded
    # rows/cols are zero (padded gate bias is 0 -> padded h/c lanes stay 0).
    w_rnn = jnp.zeros((3 * Hp, 4 * Hp), f32)
    b_gate = jnp.zeros((1, 4 * Hp), f32)
    for g in range(4):
        wg_ih = w_ih[g * H:(g + 1) * H]         # (H, 2H)
        wg_hh = w_hh[g * H:(g + 1) * H]         # (H, H)
        w_rnn = w_rnn.at[0:H, g * Hp:g * Hp + H].set(wg_ih[:, :H].T)
        w_rnn = w_rnn.at[Hp:Hp + H, g * Hp:g * Hp + H].set(wg_ih[:, H:].T)
        w_rnn = w_rnn.at[2 * Hp:2 * Hp + H, g * Hp:g * Hp + H].set(wg_hh.T)
        b_gate = b_gate.at[0, g * Hp:g * Hp + H].set(
            b_ih[g * H:(g + 1) * H] + b_hh[g * H:(g + 1) * H])

    attn_w = jnp.zeros((Hp, Hp), f32).at[:H, :H].set(
        jnp.asarray(params["attn_w"], f32))

    w_out_t = jnp.asarray(params["out_w"], f32).T        # (2H, O)
    w_out = jnp.zeros((2 * Hp, Op), f32)
    w_out = w_out.at[0:H, :O].set(w_out_t[:H])
    w_out = w_out.at[Hp:Hp + H, :O].set(w_out_t[H:])
    b_out = jnp.full((1, Op), _NEG, f32).at[0, :O].set(
        jnp.asarray(params["out_b"], f32))

    return {
        "embedding": jnp.asarray(params["embedding"], f32),
        "w_rnn": w_rnn.astype(weights_dtype),
        "b_gate": b_gate,
        "attn_w": attn_w.astype(weights_dtype),
        "w_out": w_out.astype(weights_dtype),
        "b_out": b_out,
        "H": H, "Hp": Hp, "O": O, "Op": Op,
    }


def attn_decoder_decode(prep, word_inputs, last_context, last_hidden,
                        last_cell, encoder_outputs, unroll=8):
    """Runs T teacher-forced decoder steps in ONE pallas_call, U steps per grid
    iteration.  word_inputs: (T, B) int32.

    Returns (logp_seq (T,B,O), ctx_seq (T,B,H), h_final (1,B,H),
             c_final (1,B,H), attn_seq (T,B,S))."""
    T, B = word_inputs.shape
    S = int(encoder_outputs.shape[0])
    H, Hp, O, Op = prep["H"], prep["Hp"], prep["O"], prep["Op"]
    Bp = _round_up(max(B, SUBLANE), SUBLANE)
    U = max(1, min(int(unroll), T))
    Tp = _round_up(T, U)
    n_blocks = Tp // U
    f32 = jnp.float32

    # Glue (plain JAX, outside the kernel): embedding gather + layout prep.
    emb_seq = prep["embedding"][word_inputs]                          # (T,B,H)
    emb = jnp.zeros((Tp, Bp, Hp), f32).at[:T, :B, :H].set(emb_seq.astype(f32))
    enc_bsh = jnp.zeros((Bp, S, Hp), f32).at[:B, :, :H].set(
        jnp.transpose(encoder_outputs, (1, 0, 2)).astype(f32)
    ).astype(prep["attn_w"].dtype)                                    # (Bp,S,Hp)
    init = jnp.zeros((3, Bp, Hp), f32)
    init = (init.at[0, :B, :H].set(last_hidden[0].astype(f32))
                .at[1, :B, :H].set(last_cell[0].astype(f32))
                .at[2, :B, :H].set(last_context.astype(f32)))

    step3 = lambda t: (t, 0, 0)
    const3 = lambda t: (0, 0, 0)
    const2 = lambda t: (0, 0)

    # VMEM budget: resident inputs (x2: default double-buffering) + streamed
    # blocks (x2 buffers) + slack; clamped to >= the 32 MiB scoped default.
    resident_bytes = 4 * (enc_bsh.size + init.size + prep["w_rnn"].size
                          + prep["b_gate"].size + prep["attn_w"].size
                          + prep["w_out"].size + prep["b_out"].size)
    stream_bytes = 4 * 2 * (U * Bp * Hp + U * Bp * Op + U * Bp * Hp
                            + U * Bp * S + 2 * Bp * Hp)
    vmem_limit = int(min(max(2 * resident_bytes + 2 * stream_bytes + (4 << 20),
                             32 << 20), 100 << 20))

    kern = functools.partial(attn_decoder_kernel,
                             n_valid_steps=T, guard_tail=(Tp != T))

    logp, ctx_o, attn_o, fin = pl.pallas_call(
        kern,
        grid=(n_blocks,),
        out_shape=(
            jax.ShapeDtypeStruct((Tp, Bp, Op), f32),   # per-step log-probs
            jax.ShapeDtypeStruct((Tp, Bp, Hp), f32),   # per-step context
            jax.ShapeDtypeStruct((Tp, Bp, S), f32),    # per-step attn weights
            jax.ShapeDtypeStruct((2, Bp, Hp), f32),    # final [h, c]
        ),
        in_specs=[
            pl.BlockSpec((U, Bp, Hp), step3),          # embedded words (per block)
            pl.BlockSpec((Bp, S, Hp), const3),         # encoder outputs (resident)
            pl.BlockSpec((3, Bp, Hp), const3),         # initial state (resident)
            pl.BlockSpec((3 * Hp, 4 * Hp), const2),    # fused LSTM weight
            pl.BlockSpec((1, 4 * Hp), const2),         # fused gate bias
            pl.BlockSpec((Hp, Hp), const2),            # attention weight
            pl.BlockSpec((2 * Hp, Op), const2),        # fused output weight
            pl.BlockSpec((1, Op), const2),             # output bias (padded)
        ],
        out_specs=(
            pl.BlockSpec((U, Bp, Op), step3),
            pl.BlockSpec((U, Bp, Hp), step3),
            pl.BlockSpec((U, Bp, S), step3),
            pl.BlockSpec((2, Bp, Hp), const3),         # resident, written once
        ),
        scratch_shapes=[
            pltpu.VMEM((Bp, Hp), f32),   # h carry
            pltpu.VMEM((Bp, Hp), f32),   # c carry
            pltpu.VMEM((Bp, Hp), f32),   # context carry
        ],
        compiler_params=pltpu.CompilerParams(
            dimension_semantics=("arbitrary",),
            vmem_limit_bytes=vmem_limit),
    )(emb, enc_bsh, init, prep["w_rnn"], prep["b_gate"],
      prep["attn_w"], prep["w_out"], prep["b_out"])

    output = logp[:T, :B, :O]            # (T, B, O)
    ctx_seq = ctx_o[:T, :B, :H]          # (T, B, H)
    attn_seq = attn_o[:T, :B, :]         # (T, B, S)
    h_fin = fin[0:1, :B, :H]             # (1, B, H)  (n_layers=1 dim)
    c_fin = fin[1:2, :B, :H]
    return output, ctx_seq, h_fin, c_fin, attn_seq


def attn_decoder_forward(prep, word_input, last_context, last_hidden,
                         last_cell, encoder_outputs):
    """Single decode step: mirrors AttnDecoderRNN.forward exactly."""
    out, ctx, h, c, attn = attn_decoder_decode(
        prep, word_input[None, :], last_context, last_hidden, last_cell,
        encoder_outputs, unroll=1)
    return out[0], ctx[0], h, c, attn[0][:, None, :]


def reference_forward(params, word_input, last_context, last_hidden,
                      last_cell, encoder_outputs):
    """Pure-JAX reference matching PyTorch semantics (for verification)."""
    emb = params["embedding"][word_input]
    x = jnp.concatenate([emb, last_context], axis=1)
    gates = (x @ params["w_ih"].T + last_hidden[0] @ params["w_hh"].T
             + params["b_ih"] + params["b_hh"])
    i, f, g, o = jnp.split(gates, 4, axis=1)
    i, f, o = jax.nn.sigmoid(i), jax.nn.sigmoid(f), jax.nn.sigmoid(o)
    g = jnp.tanh(g)
    c = f * last_cell[0] + i * g
    h = o * jnp.tanh(c)
    energy = encoder_outputs @ params["attn_w"].T + params["attn_b"]   # (S,B,H)
    scores = jnp.sum(energy * h[None], axis=-1)                        # (S,B)
    w = jax.nn.softmax(scores, axis=0)
    attn_weights = w.T[:, None, :]
    context = jnp.einsum("sb,sbh->bh", w, encoder_outputs)
    logits = (jnp.concatenate([h, context], axis=1) @ params["out_w"].T
              + params["out_b"])
    output = jax.nn.log_softmax(logits, axis=1)
    return output, context, h[None], c[None], attn_weights


if __name__ == "__main__":
    H, O, S, B = 32, 16, 8, 2     # hidden_size, output_size(vocab), seq, batch
    key = jax.random.PRNGKey(0)
    ks = jax.random.split(key, 16)

    def rn(k, shape):
        return (0.1 * jax.random.normal(k, shape)).astype(jnp.float32)

    params = {
        "embedding": rn(ks[0], (O, H)),        # nn.Embedding(output_size, H)
        "w_ih": rn(ks[1], (4 * H, 2 * H)),     # LSTM weight_ih_l0
        "w_hh": rn(ks[2], (4 * H, H)),         # LSTM weight_hh_l0
        "b_ih": rn(ks[3], (4 * H,)),
        "b_hh": rn(ks[4], (4 * H,)),
        "attn_w": rn(ks[5], (H, H)),           # Attn('general') Linear(H, H)
        "attn_b": rn(ks[6], (H,)),
        "out_w": rn(ks[7], (O, 2 * H)),        # Linear(2H, output_size)
        "out_b": rn(ks[8], (O,)),
    }

    word_input = jax.random.randint(ks[9], (B,), 0, O, dtype=jnp.int32)
    last_context = rn(ks[10], (B, H))
    last_hidden = rn(ks[11], (1, B, H))
    last_cell = rn(ks[12], (1, B, H))
    encoder_outputs = rn(ks[13], (S, B, H))

    prep = prepare_params(params)

    # ---- single forward step (matches AttnDecoderRNN.forward) ----------------
    outs = attn_decoder_forward(prep, word_input, last_context, last_hidden,
                                last_cell, encoder_outputs)
    outs = jax.block_until_ready(outs)
    refs = reference_forward(params, word_input, last_context, last_hidden,
                             last_cell, encoder_outputs)
    for got, want in zip(outs, refs):
        np.testing.assert_allclose(np.asarray(got), np.asarray(want),
                                   rtol=1e-3, atol=1e-3)

    # ---- fused multi-step decode: T=6 with unroll=4 exercises the tail guard -
    T = 6
    word_seq = jax.random.randint(ks[14], (T, B), 0, O, dtype=jnp.int32)
    fused = attn_decoder_decode(prep, word_seq, last_context, last_hidden,
                                last_cell, encoder_outputs, unroll=4)
    fused = jax.block_until_ready(fused)
    logp_seq, ctx_seq, h_fin, c_fin, attn_seq = fused

    ctx, hid, cell = last_context, last_hidden, last_cell
    for t in range(T):
        r_out, r_ctx, r_hid, r_cell, r_attn = reference_forward(
            params, word_seq[t], ctx, hid, cell, encoder_outputs)
        np.testing.assert_allclose(np.asarray(logp_seq[t]), np.asarray(r_out),
                                   rtol=1e-3, atol=1e-3)
        np.testing.assert_allclose(np.asarray(ctx_seq[t]), np.asarray(r_ctx),
                                   rtol=1e-3, atol=1e-3)
        np.testing.assert_allclose(np.asarray(attn_seq[t]),
                                   np.asarray(r_attn[:, 0, :]),
                                   rtol=1e-3, atol=1e-3)
        ctx, hid, cell = r_ctx, r_hid, r_cell
    # final hidden / cell state (per-step h/c are intentionally not emitted)
    np.testing.assert_allclose(np.asarray(h_fin), np.asarray(hid),
                               rtol=1e-3, atol=1e-3)
    np.testing.assert_allclose(np.asarray(c_fin), np.asarray(cell),
                               rtol=1e-3, atol=1e-3)

    print("KERNEL_OK")
</pallas_src>

<mosaic_0001>
module attributes {stable_mosaic.version = 11 : i64} {
  func.func @attn_decoder_kernel(%arg0: i32, %arg1: memref<1x8x128xf32, #tpu.memory_space<vmem>>, %arg2: memref<8x8x128xf32, #tpu.memory_space<vmem>>, %arg3: memref<3x8x128xf32, #tpu.memory_space<vmem>>, %arg4: memref<384x512xf32, #tpu.memory_space<vmem>>, %arg5: memref<1x512xf32, #tpu.memory_space<vmem>>, %arg6: memref<128x128xf32, #tpu.memory_space<vmem>>, %arg7: memref<256x128xf32, #tpu.memory_space<vmem>>, %arg8: memref<1x128xf32, #tpu.memory_space<vmem>>, %arg9: memref<1x8x128xf32, #tpu.memory_space<vmem>>, %arg10: memref<1x8x128xf32, #tpu.memory_space<vmem>>, %arg11: memref<1x8x8xf32, #tpu.memory_space<vmem>>, %arg12: memref<2x8x128xf32, #tpu.memory_space<vmem>>, %arg13: memref<8x128xf32, #tpu.memory_space<vmem>>, %arg14: memref<8x128xf32, #tpu.memory_space<vmem>>, %arg15: memref<8x128xf32, #tpu.memory_space<vmem>>) attributes {dimension_semantics = [#tpu.dimension_semantics<arbitrary>], iteration_bounds = array<i64: 1>, scalar_prefetch = 0 : i64, scratch_operands = 3 : i64, tpu.core_type = #tpu.core_type<tc>, window_params = [{transform_indices = @transform_0, window_bounds = array<i64: 1, 8, 128>}, {pipeline_mode = #tpu.pipeline_mode<synchronous>, transform_indices = @transform_1, window_bounds = array<i64: 8, 8, 128>}, {pipeline_mode = #tpu.pipeline_mode<synchronous>, transform_indices = @transform_2, window_bounds = array<i64: 3, 8, 128>}, {pipeline_mode = #tpu.pipeline_mode<synchronous>, transform_indices = @transform_3, window_bounds = array<i64: 384, 512>}, {pipeline_mode = #tpu.pipeline_mode<synchronous>, transform_indices = @transform_4, window_bounds = array<i64: 1, 512>}, {pipeline_mode = #tpu.pipeline_mode<synchronous>, transform_indices = @transform_5, window_bounds = array<i64: 128, 128>}, {pipeline_mode = #tpu.pipeline_mode<synchronous>, transform_indices = @transform_6, window_bounds = array<i64: 256, 128>}, {pipeline_mode = #tpu.pipeline_mode<synchronous>, transform_indices = @transform_7, window_bounds = array<i64: 1, 128>}, {transform_indices = @transform_8, window_bounds = array<i64: 1, 8, 128>}, {transform_indices = @transform_9, window_bounds = array<i64: 1, 8, 128>}, {transform_indices = @transform_10, window_bounds = array<i64: 1, 8, 8>}, {pipeline_mode = #tpu.pipeline_mode<synchronous>, transform_indices = @transform_11, window_bounds = array<i64: 2, 8, 128>}]} {
    %c0_i32 = arith.constant 0 : i32
    %0 = arith.cmpi eq, %arg0, %c0_i32 : i32
    %1 = arith.extui %0 : i1 to i32
    %c0_i32_0 = arith.constant 0 : i32
    %2 = arith.cmpi ne, %1, %c0_i32_0 : i32
    scf.if %2 {
      %c0_53 = arith.constant 0 : index
      %c0_54 = arith.constant 0 : index
      %c0_55 = arith.constant 0 : index
      %95 = vector.load %arg3[%c0_53, %c0_54, %c0_55] : memref<3x8x128xf32, #tpu.memory_space<vmem>>, vector<1x8x128xf32>
      %96 = vector.shape_cast %95 : vector<1x8x128xf32> to vector<8x128xf32>
      %c0_56 = arith.constant 0 : index
      %c0_57 = arith.constant 0 : index
      %97 = vector.load %arg13[%c0_56, %c0_57] : memref<8x128xf32, #tpu.memory_space<vmem>>, vector<8x128xf32>
      tpu.vector_store %arg13[%c0_56, %c0_57], %96 {strides = array<i32>} : memref<8x128xf32, #tpu.memory_space<vmem>>, vector<8x128xf32>,
      %c1_58 = arith.constant 1 : index
      %c0_59 = arith.constant 0 : index
      %c0_60 = arith.constant 0 : index
      %98 = vector.load %arg3[%c1_58, %c0_59, %c0_60] : memref<3x8x128xf32, #tpu.memory_space<vmem>>, vector<1x8x128xf32>
      %99 = vector.shape_cast %98 : vector<1x8x128xf32> to vector<8x128xf32>
      %c0_61 = arith.constant 0 : index
      %c0_62 = arith.constant 0 : index
      %100 = vector.load %arg14[%c0_61, %c0_62] : memref<8x128xf32, #tpu.memory_space<vmem>>, vector<8x128xf32>
      tpu.vector_store %arg14[%c0_61, %c0_62], %99 {strides = array<i32>} : memref<8x128xf32, #tpu.memory_space<vmem>>, vector<8x128xf32>,
      %c2 = arith.constant 2 : index
      %c0_63 = arith.constant 0 : index
      %c0_64 = arith.constant 0 : index
      %101 = vector.load %arg3[%c2, %c0_63, %c0_64] : memref<3x8x128xf32, #tpu.memory_space<vmem>>, vector<1x8x128xf32>
      %102 = vector.shape_cast %101 : vector<1x8x128xf32> to vector<8x128xf32>
      %c0_65 = arith.constant 0 : index
      %c0_66 = arith.constant 0 : index
      %103 = vector.load %arg15[%c0_65, %c0_66] : memref<8x128xf32, #tpu.memory_space<vmem>>, vector<8x128xf32>
      tpu.vector_store %arg15[%c0_65, %c0_66], %102 {strides = array<i32>} : memref<8x128xf32, #tpu.memory_space<vmem>>, vector<8x128xf32>,
    } else {
    }
    %c0 = arith.constant 0 : index
    %c0_1 = arith.constant 0 : index
    %c0_2 = arith.constant 0 : index
    %3 = vector.load %arg2[%c0, %c0_1, %c0_2] : memref<8x8x128xf32, #tpu.memory_space<vmem>>, vector<8x8x128xf32>
    %c0_3 = arith.constant 0 : index
    %c0_4 = arith.constant 0 : index
    %4 = vector.load %arg4[%c0_3, %c0_4] : memref<384x512xf32, #tpu.memory_space<vmem>>, vector<384x512xf32>
    %c0_5 = arith.constant 0 : index
    %c0_6 = arith.constant 0 : index
    %5 = vector.load %arg5[%c0_5, %c0_6] : memref<1x512xf32, #tpu.memory_space<vmem>>, vector<1x512xf32>
    %c0_7 = arith.constant 0 : index
    %c0_8 = arith.constant 0 : index
    %6 = vector.load %arg6[%c0_7, %c0_8] : memref<128x128xf32, #tpu.memory_space<vmem>>, vector<128x128xf32>
    %c0_9 = arith.constant 0 : index
    %c0_10 = arith.constant 0 : index
    %7 = vector.load %arg7[%c0_9, %c0_10] : memref<256x128xf32, #tpu.memory_space<vmem>>, vector<256x128xf32>
    %c0_11 = arith.constant 0 : index
    %c0_12 = arith.constant 0 : index
    %8 = vector.load %arg8[%c0_11, %c0_12] : memref<1x128xf32, #tpu.memory_space<vmem>>, vector<1x128xf32>
    %c0_13 = arith.constant 0 : index
    %c0_14 = arith.constant 0 : index
    %9 = vector.load %arg13[%c0_13, %c0_14] : memref<8x128xf32, #tpu.memory_space<vmem>>, vector<8x128xf32>
    %c0_15 = arith.constant 0 : index
    %c0_16 = arith.constant 0 : index
    %10 = vector.load %arg14[%c0_15, %c0_16] : memref<8x128xf32, #tpu.memory_space<vmem>>, vector<8x128xf32>
    %c0_17 = arith.constant 0 : index
    %c0_18 = arith.constant 0 : index
    %11 = vector.load %arg15[%c0_17, %c0_18] : memref<8x128xf32, #tpu.memory_space<vmem>>, vector<8x128xf32>
    %c0_19 = arith.constant 0 : index
    %c0_20 = arith.constant 0 : index
    %c0_21 = arith.constant 0 : index
    %12 = vector.load %arg1[%c0_19, %c0_20, %c0_21] : memref<1x8x128xf32, #tpu.memory_space<vmem>>, vector<1x8x128xf32>
    %13 = vector.shape_cast %12 : vector<1x8x128xf32> to vector<8x128xf32>
    %14 = tpu.concatenate %13, %11, %9 in 1 : vector<8x128xf32>, vector<8x128xf32>, vector<8x128xf32> -> vector<8x384xf32>
    %cst = arith.constant dense<0.000000e+00> : vector<8x512xf32>
    %15 = tpu.matmul %14, %4, %cst {dimension_numbers = #tpu.dot_dimension_numbers<[1], [0], [0], [1], [0, 0, 1, 1], [], []>} : vector<8x384xf32>, vector<384x512xf32>, vector<8x512xf32> -> vector<8x512xf32>
    %16 = vector.broadcast %5 : vector<1x512xf32> to vector<8x512xf32>
    %17 = arith.addf %15, %16 : vector<8x512xf32>
    %18 = vector.extract_strided_slice %17 {offsets = [0, 0], sizes = [8, 128], strides = [1, 1]} : vector<8x512xf32> to vector<8x128xf32>
    %19 = arith.negf %18 : vector<8x128xf32>
    %20 = math.exp %19 : vector<8x128xf32>
    %cst_22 = arith.constant 1.000000e+00 : f32
    %21 = vector.broadcast %cst_22 : f32 to vector<8x128xf32>
    %22 = arith.addf %21, %20 : vector<8x128xf32>
    %23 = arith.divf %21, %22 : vector<8x128xf32>
    %24 = vector.extract_strided_slice %17 {offsets = [0, 128], sizes = [8, 128], strides = [1, 1]} : vector<8x512xf32> to vector<8x128xf32>
    %25 = arith.negf %24 : vector<8x128xf32>
    %26 = math.exp %25 : vector<8x128xf32>
    %cst_23 = arith.constant 1.000000e+00 : f32
    %27 = vector.broadcast %cst_23 : f32 to vector<8x128xf32>
    %28 = arith.addf %27, %26 : vector<8x128xf32>
    %29 = arith.divf %27, %28 : vector<8x128xf32>
    %30 = vector.extract_strided_slice %17 {offsets = [0, 256], sizes = [8, 128], strides = [1, 1]} : vector<8x512xf32> to vector<8x128xf32>
    %31 = math.tanh %30 : vector<8x128xf32>
    %32 = vector.extract_strided_slice %17 {offsets = [0, 384], sizes = [8, 128], strides = [1, 1]} : vector<8x512xf32> to vector<8x128xf32>
    %33 = arith.negf %32 : vector<8x128xf32>
    %34 = math.exp %33 : vector<8x128xf32>
    %cst_24 = arith.constant 1.000000e+00 : f32
    %35 = vector.broadcast %cst_24 : f32 to vector<8x128xf32>
    %36 = arith.addf %35, %34 : vector<8x128xf32>
    %37 = arith.divf %35, %36 : vector<8x128xf32>
    %38 = arith.mulf %29, %10 : vector<8x128xf32>
    %39 = arith.mulf %23, %31 : vector<8x128xf32>
    %40 = arith.addf %38, %39 : vector<8x128xf32>
    %41 = math.tanh %40 : vector<8x128xf32>
    %42 = arith.mulf %37, %41 : vector<8x128xf32>
    %cst_25 = arith.constant dense<0.000000e+00> : vector<8x128xf32>
    %43 = tpu.matmul %42, %6, %cst_25 {dimension_numbers = #tpu.dot_dimension_numbers<[1], [0], [0], [1], [0, 0, 1, 1], [], []>} : vector<8x128xf32>, vector<128x128xf32>, vector<8x128xf32> -> vector<8x128xf32>
    %44 = vector.shape_cast %43 : vector<8x128xf32> to vector<8x1x128xf32>
    %45 = vector.broadcast %44 : vector<8x1x128xf32> to vector<8x8x128xf32>
    %46 = arith.mulf %3, %45 : vector<8x8x128xf32>
    %cst_26 = arith.constant dense<0.000000e+00> : vector<8x8xf32>
    %47 = vector.multi_reduction <add>, %46, %cst_26 [2] : vector<8x8x128xf32> to vector<8x8xf32>
    %cst_27 = arith.constant dense<0xFF800000> : vector<8xf32>
    %48 = vector.multi_reduction <maximumf>, %47, %cst_27 [1] : vector<8x8xf32> to vector<8xf32>
    %49 = vector.shape_cast %48 : vector<8xf32> to vector<8x1xf32>
    %50 = vector.broadcast %49 : vector<8x1xf32> to vector<8x8xf32>
    %51 = arith.subf %47, %50 : vector<8x8xf32>
    %52 = math.exp %51 : vector<8x8xf32>
    %cst_28 = arith.constant dense<0.000000e+00> : vector<8xf32>
    %53 = vector.multi_reduction <add>, %52, %cst_28 [1] : vector<8x8xf32> to vector<8xf32>
    %54 = vector.shape_cast %53 : vector<8xf32> to vector<8x1xf32>
    %55 = tpu.reciprocal %54 {approx = true} : vector<8x1xf32> -> vector<8x1xf32>
    %56 = vector.broadcast %55 : vector<8x1xf32> to vector<8x8xf32>
    %57 = arith.mulf %52, %56 : vector<8x8xf32>
    %58 = vector.shape_cast %57 : vector<8x8xf32> to vector<8x8x1xf32>
    %59 = vector.broadcast %58 : vector<8x8x1xf32> to vector<8x8x128xf32>
    %60 = arith.mulf %59, %3 : vector<8x8x128xf32>
    %cst_29 = arith.constant dense<0.000000e+00> : vector<8x128xf32>
    %61 = vector.multi_reduction <add>, %60, %cst_29 [1] : vector<8x8x128xf32> to vector<8x128xf32>
    %62 = tpu.concatenate %42, %61 in 1 : vector<8x128xf32>, vector<8x128xf32> -> vector<8x256xf32>
    %cst_30 = arith.constant dense<0.000000e+00> : vector<8x128xf32>
    %63 = tpu.matmul %62, %7, %cst_30 {dimension_numbers = #tpu.dot_dimension_numbers<[1], [0], [0], [1], [0, 0, 1, 1], [], []>} : vector<8x256xf32>, vector<256x128xf32>, vector<8x128xf32> -> vector<8x128xf32>
    %64 = vector.broadcast %8 : vector<1x128xf32> to vector<8x128xf32>
    %65 = arith.addf %63, %64 : vector<8x128xf32>
    %cst_31 = arith.constant dense<0xFF800000> : vector<8xf32>
    %66 = vector.multi_reduction <maximumf>, %65, %cst_31 [1] : vector<8x128xf32> to vector<8xf32>
    %67 = vector.shape_cast %66 : vector<8xf32> to vector<8x1xf32>
    %68 = vector.broadcast %67 : vector<8x1xf32> to vector<8x128xf32>
    %69 = arith.subf %65, %68 : vector<8x128xf32>
    %70 = math.exp %69 : vector<8x128xf32>
    %cst_32 = arith.constant dense<0.000000e+00> : vector<8xf32>
    %71 = vector.multi_reduction <add>, %70, %cst_32 [1] : vector<8x128xf32> to vector<8xf32>
    %72 = vector.shape_cast %71 : vector<8xf32> to vector<8x1xf32>
    %73 = math.log %72 : vector<8x1xf32>
    %74 = arith.addf %67, %73 : vector<8x1xf32>
    %75 = vector.broadcast %74 : vector<8x1xf32> to vector<8x128xf32>
    %76 = arith.subf %65, %75 : vector<8x128xf32>
    %c0_33 = arith.constant 0 : index
    %c0_34 = arith.constant 0 : index
    %c0_35 = arith.constant 0 : index
    %77 = vector.load %arg9[%c0_33, %c0_34, %c0_35] : memref<1x8x128xf32, #tpu.memory_space<vmem>>, vector<1x8x128xf32>
    %78 = vector.shape_cast %77 : vector<1x8x128xf32> to vector<8x128xf32>
    %79 = vector.shape_cast %76 : vector<8x128xf32> to vector<1x8x128xf32>
    tpu.vector_store %arg9[%c0_33, %c0_34, %c0_35], %79 {strides = array<i32>} : memref<1x8x128xf32, #tpu.memory_space<vmem>>, vector<1x8x128xf32>,
    %c0_36 = arith.constant 0 : index
    %c0_37 = arith.constant 0 : index
    %c0_38 = arith.constant 0 : index
    %80 = vector.load %arg10[%c0_36, %c0_37, %c0_38] : memref<1x8x128xf32, #tpu.memory_space<vmem>>, vector<1x8x128xf32>
    %81 = vector.shape_cast %80 : vector<1x8x128xf32> to vector<8x128xf32>
    %82 = vector.shape_cast %61 : vector<8x128xf32> to vector<1x8x128xf32>
    tpu.vector_store %arg10[%c0_36, %c0_37, %c0_38], %82 {strides = array<i32>} : memref<1x8x128xf32, #tpu.memory_space<vmem>>, vector<1x8x128xf32>,
    %c0_39 = arith.constant 0 : index
    %c0_40 = arith.constant 0 : index
    %c0_41 = arith.constant 0 : index
    %83 = vector.load %arg11[%c0_39, %c0_40, %c0_41] : memref<1x8x8xf32, #tpu.memory_space<vmem>>, vector<1x8x8xf32>
    %84 = vector.shape_cast %83 : vector<1x8x8xf32> to vector<8x8xf32>
    %85 = vector.shape_cast %57 : vector<8x8xf32> to vector<1x8x8xf32>
    tpu.vector_store %arg11[%c0_39, %c0_40, %c0_41], %85 {strides = array<i32>} : memref<1x8x8xf32, #tpu.memory_space<vmem>>, vector<1x8x8xf32>,
    %c0_42 = arith.constant 0 : index
    %c0_43 = arith.constant 0 : index
    %86 = vector.load %arg13[%c0_42, %c0_43] : memref<8x128xf32, #tpu.memory_space<vmem>>, vector<8x128xf32>
    tpu.vector_store %arg13[%c0_42, %c0_43], %42 {strides = array<i32>} : memref<8x128xf32, #tpu.memory_space<vmem>>, vector<8x128xf32>,
    %c0_44 = arith.constant 0 : index
    %c0_45 = arith.constant 0 : index
    %87 = vector.load %arg14[%c0_44, %c0_45] : memref<8x128xf32, #tpu.memory_space<vmem>>, vector<8x128xf32>
    tpu.vector_store %arg14[%c0_44, %c0_45], %40 {strides = array<i32>} : memref<8x128xf32, #tpu.memory_space<vmem>>, vector<8x128xf32>,
    %c0_46 = arith.constant 0 : index
    %c0_47 = arith.constant 0 : index
    %88 = vector.load %arg15[%c0_46, %c0_47] : memref<8x128xf32, #tpu.memory_space<vmem>>, vector<8x128xf32>
    tpu.vector_store %arg15[%c0_46, %c0_47], %61 {strides = array<i32>} : memref<8x128xf32, #tpu.memory_space<vmem>>, vector<8x128xf32>,
    %c0_48 = arith.constant 0 : index
    %c0_49 = arith.constant 0 : index
    %c0_50 = arith.constant 0 : index
    %89 = vector.load %arg12[%c0_48, %c0_49, %c0_50] : memref<2x8x128xf32, #tpu.memory_space<vmem>>, vector<1x8x128xf32>
    %90 = vector.shape_cast %89 : vector<1x8x128xf32> to vector<8x128xf32>
    %91 = vector.shape_cast %42 : vector<8x128xf32> to vector<1x8x128xf32>
    tpu.vector_store %arg12[%c0_48, %c0_49, %c0_50], %91 {strides = array<i32>} : memref<2x8x128xf32, #tpu.memory_space<vmem>>, vector<1x8x128xf32>,
    %c1 = arith.constant 1 : index
    %c0_51 = arith.constant 0 : index
    %c0_52 = arith.constant 0 : index
    %92 = vector.load %arg12[%c1, %c0_51, %c0_52] : memref<2x8x128xf32, #tpu.memory_space<vmem>>, vector<1x8x128xf32>
    %93 = vector.shape_cast %92 : vector<1x8x128xf32> to vector<8x128xf32>
    %94 = vector.shape_cast %40 : vector<8x128xf32> to vector<1x8x128xf32>
    tpu.vector_store %arg12[%c1, %c0_51, %c0_52], %94 {strides = array<i32>} : memref<2x8x128xf32, #tpu.memory_space<vmem>>, vector<1x8x128xf32>,
    return
  }
  func.func @transform_0(%arg0: i32) -> (i32, i32, i32) {
    %c0_i32 = arith.constant 0 : i32
    %c0_i32_0 = arith.constant 0 : i32
    %c0_i32_1 = arith.constant 0 : i32
    return %arg0, %c0_i32, %c0_i32_0 : i32, i32, i32
  }
  func.func @transform_1(%arg0: i32) -> (i32, i32, i32) {
    %c0_i32 = arith.constant 0 : i32
    %c0_i32_0 = arith.constant 0 : i32
    %c0_i32_1 = arith.constant 0 : i32
    %c0_i32_2 = arith.constant 0 : i32
    return %c0_i32, %c0_i32_0, %c0_i32_1 : i32, i32, i32
  }
  func.func @transform_2(%arg0: i32) -> (i32, i32, i32) {
    %c0_i32 = arith.constant 0 : i32
    %c0_i32_0 = arith.constant 0 : i32
    %c0_i32_1 = arith.constant 0 : i32
    %c0_i32_2 = arith.constant 0 : i32
    return %c0_i32, %c0_i32_0, %c0_i32_1 : i32, i32, i32
  }
  func.func @transform_3(%arg0: i32) -> (i32, i32) {
    %c0_i32 = arith.constant 0 : i32
    %c0_i32_0 = arith.constant 0 : i32
    %c0_i32_1 = arith.constant 0 : i32
    return %c0_i32, %c0_i32_0 : i32, i32
  }
  func.func @transform_4(%arg0: i32) -> (i32, i32) {
    %c0_i32 = arith.constant 0 : i32
    %c0_i32_0 = arith.constant 0 : i32
    %c0_i32_1 = arith.constant 0 : i32
    return %c0_i32, %c0_i32_0 : i32, i32
  }
  func.func @transform_5(%arg0: i32) -> (i32, i32) {
    %c0_i32 = arith.constant 0 : i32
    %c0_i32_0 = arith.constant 0 : i32
    %c0_i32_1 = arith.constant 0 : i32
    return %c0_i32, %c0_i32_0 : i32, i32
  }
  func.func @transform_6(%arg0: i32) -> (i32, i32) {
    %c0_i32 = arith.constant 0 : i32
    %c0_i32_0 = arith.constant 0 : i32
    %c0_i32_1 = arith.constant 0 : i32
    return %c0_i32, %c0_i32_0 : i32, i32
  }
  func.func @transform_7(%arg0: i32) -> (i32, i32) {
    %c0_i32 = arith.constant 0 : i32
    %c0_i32_0 = arith.constant 0 : i32
    %c0_i32_1 = arith.constant 0 : i32
    return %c0_i32, %c0_i32_0 : i32, i32
  }
  func.func @transform_8(%arg0: i32) -> (i32, i32, i32) {
    %c0_i32 = arith.constant 0 : i32
    %c0_i32_0 = arith.constant 0 : i32
    %c0_i32_1 = arith.constant 0 : i32
    return %arg0, %c0_i32, %c0_i32_0 : i32, i32, i32
  }
  func.func @transform_9(%arg0: i32) -> (i32, i32, i32) {
    %c0_i32 = arith.constant 0 : i32
    %c0_i32_0 = arith.constant 0 : i32
    %c0_i32_1 = arith.constant 0 : i32
    return %arg0, %c0_i32, %c0_i32_0 : i32, i32, i32
  }
  func.func @transform_10(%arg0: i32) -> (i32, i32, i32) {
    %c0_i32 = arith.constant 0 : i32
    %c0_i32_0 = arith.constant 0 : i32
    %c0_i32_1 = arith.constant 0 : i32
    return %arg0, %c0_i32, %c0_i32_0 : i32, i32, i32
  }
  func.func @transform_11(%arg0: i32) -> (i32, i32, i32) {
    %c0_i32 = arith.constant 0 : i32
    %c0_i32_0 = arith.constant 0 : i32
    %c0_i32_1 = arith.constant 0 : i32
    %c0_i32_2 = arith.constant 0 : i32
    return %c0_i32, %c0_i32_0, %c0_i32_1 : i32, i32, i32
  }
}

</mosaic_0001>

<llo_original>
// kernel: tpu_custom_call.1
$region0: #{tpu_custom_call.1}
  #allocation0 [shape = 'u32[]', space=smem, size = 0x4, offset = 0x4, fixed_abs, tag = 'smem constant byte address 0x4 - core index']
  #allocation1 [shape = 'u32[144,128]{1,0:T(1,128)}', space=vmem, size = 0x12000, scoped, tag = 'internal scratch']
  #allocation2 [shape = 'f32[8,128]{1,0:T(8,128)}', space=vmem, size = 0x1000, scoped, tag = 'scratch operand']
  #allocation3 [shape = 'f32[8,128]{1,0:T(8,128)}', space=vmem, size = 0x1000, scoped, tag = 'scratch operand']
  #allocation4 [shape = 'f32[8,128]{1,0:T(8,128)}', space=vmem, size = 0x1000, scoped, tag = 'scratch operand']
  %s0 = inlined_call_operand.hbm [shape: f32[1,8,128], index: 0, kind: input, shape index: {}]
  %s1 = inlined_call_operand.hbm [shape: f32[8,8,128], index: 1, kind: input, shape index: {}]
  %s2 = inlined_call_operand.hbm [shape: f32[3,8,128], index: 2, kind: input, shape index: {}]
  %s3 = inlined_call_operand.hbm [shape: f32[384,512], index: 3, kind: input, shape index: {}]
  %s4 = inlined_call_operand.vmem [shape: f32[1,512], index: 4, kind: input, shape index: {}]
  %s5 = inlined_call_operand.hbm [shape: f32[128,128], index: 5, kind: input, shape index: {}]
  %s6 = inlined_call_operand.hbm [shape: f32[256,128], index: 6, kind: input, shape index: {}]
  %s7 = inlined_call_operand.vmem [shape: f32[1,128], index: 7, kind: input, shape index: {}]
  %s8 = inlined_call_operand.hbm [shape: f32[1,8,128], index: 8, kind: output, shape index: {0}]
  %s9 = inlined_call_operand.hbm [shape: f32[1,8,128], index: 9, kind: output, shape index: {1}]
  %s10 = inlined_call_operand.hbm [shape: f32[1,8,8], index: 10, kind: output, shape index: {2}]
  %s11 = inlined_call_operand.hbm [shape: f32[2,8,128], index: 11, kind: output, shape index: {3}]
  %12 = xla_tuple %s8, %s9, %s10, %s11
  %s13 = sld [smem:[#allocation0]]
  $region94: #{tpu_custom_call.1} parent=0
    _
  %s15 = ssub.s32 1, %s13
  %s16 = scalar_select 0, %s15, %s13
  $region1: #{tpu_custom_call.1} parent=0
    #allocation5 [shape = 'u8[4096]{0}', space=vmem, size = 0x1000, scoped, tag = 'input window, operand 0, single buffered']
    #allocation6 [shape = 's32[1]{0}', space=sflag, size = 0x4, scoped, tag = 'scoped memory for tpu_custom_call.1']
    #allocation7 [shape = 's32[1]{0}', space=sflag, size = 0x4, scoped, tag = 'scoped memory for tpu_custom_call.1']
    #allocation8 [shape = 'u8[32768]{0}', space=vmem, size = 0x8000, scoped, tag = 'input window, operand 1, single buffered']
    #allocation9 [shape = 's32[1]{0}', space=sflag, size = 0x4, scoped, tag = 'scoped memory for tpu_custom_call.1']
    #allocation10 [shape = 'u8[12288]{0}', space=vmem, size = 0x3000, scoped, tag = 'input window, operand 2, single buffered']
    #allocation11 [shape = 'u8[786432]{0}', space=vmem, size = 0xc0000, scoped, tag = 'input window, operand 3, single buffered']
    #allocation12 [shape = 's32[1]{0}', space=sflag, size = 0x4, scoped, tag = 'scoped memory for tpu_custom_call.1']
    #allocation13 [shape = 'u8[65536]{0}', space=vmem, size = 0x10000, scoped, tag = 'input window, operand 5, single buffered']
    #allocation14 [shape = 'u8[131072]{0}', space=vmem, size = 0x20000, scoped, tag = 'input window, operand 6, single buffered']
    #allocation15 [shape = 's32[1]{0}', space=sflag, size = 0x4, scoped, tag = 'scoped memory for tpu_custom_call.1']
    #allocation16 [shape = 'u8[4096]{0}', space=vmem, size = 0x1000, scoped, tag = 'output window, operand 0, single buffered']
    #allocation17 [shape = 'u8[4096]{0}', space=vmem, size = 0x1000, scoped, tag = 'output window, operand 1, single buffered']
    #allocation18 [shape = 's32[1]{0}', space=sflag, size = 0x4, scoped, tag = 'scoped memory for tpu_custom_call.1']
    #allocation19 [shape = 'u8[4096]{0}', space=vmem, size = 0x1000, scoped, tag = 'output window, operand 2, single buffered']
    #allocation20 [shape = 'u8[8192]{0}', space=vmem, size = 0x2000, scoped, tag = 'output window, operand 3, single buffered']
    #allocation21 [shape = 's32[1]{0}', space=sflag, size = 0x4, scoped, tag = 'scoped memory for tpu_custom_call.1']
    %17 = vsyncpa [#allocation6], 0
    %18 = vsyncpa [#allocation9], 0
    %19 = vsyncpa [#allocation12], 0
    %20 = vsyncpa [#allocation15], 0
    %21 = vsyncpa [#allocation7], 0
    %22 = vsyncpa [#allocation18], 0
    %23 = vsyncpa [#allocation21], 0
    // Predicated region
    $region2: #{tpu_custom_call.1} parent=1 // pred_check
      _
    $region3: #{tpu_custom_call.1} parent=1 // pred_check_branch
      %25 = sbr.rel (0) target = $region5
    $region4: #{tpu_custom_call.1} parent=1 // pred_region
      %s27 = ssub.s32 128, 128
      %28 = vsyncadd [#allocation6], %s27
      %s30 = sshll.u32 [#allocation5], 4
      %s31 = int_to_ptr.vmem [resolvable:$true] %s30
      %33 = dma.hbm_to_vmem [thread:$0]  %s0, 128, %s31, [#allocation6]
    $region5: #{tpu_custom_call.1} parent=1 // pred_fallthru
      _
    // Predicated region
    $region6: #{tpu_custom_call.1} parent=1 // pred_check
      _
    $region7: #{tpu_custom_call.1} parent=1 // pred_check_branch
      %35 = sbr.rel (0) target = $region9
    $region8: #{tpu_custom_call.1} parent=1 // pred_region
      %s37 = ssub.s32 1024, 1024
      %38 = vsyncadd [#allocation9], %s37
      %s39 = sshll.u32 [#allocation8], 4
      %s40 = int_to_ptr.vmem [resolvable:$true] %s39
      %45 = dma.hbm_to_vmem [thread:$0]  %s1, 1024, %s40, [#allocation9], 128, 128, 8
    $region9: #{tpu_custom_call.1} parent=1 // pred_fallthru
      _
    // Predicated region
    $region10: #{tpu_custom_call.1} parent=1 // pred_check
      _
    $region11: #{tpu_custom_call.1} parent=1 // pred_check_branch
      %47 = sbr.rel (0) target = $region13
    $region12: #{tpu_custom_call.1} parent=1 // pred_region
      %s49 = ssub.s32 384, 384
      %50 = vsyncadd [#allocation9], %s49
      %s51 = sshll.u32 [#allocation10], 4
      %s52 = int_to_ptr.vmem [resolvable:$true] %s51
      %57 = dma.hbm_to_vmem [thread:$0]  %s2, 384, %s52, [#allocation9], 128, 128, 8
    $region13: #{tpu_custom_call.1} parent=1 // pred_fallthru
      _
    // Predicated region
    $region14: #{tpu_custom_call.1} parent=1 // pred_check
      _
    $region15: #{tpu_custom_call.1} parent=1 // pred_check_branch
      %59 = sbr.rel (0) target = $region17
    $region16: #{tpu_custom_call.1} parent=1 // pred_region
      %s61 = ssub.s32 24576, 24576
      %62 = vsyncadd [#allocation12], %s61
      %s63 = sshll.u32 [#allocation11], 4
      %s64 = int_to_ptr.vmem [resolvable:$true] %s63
      %69 = dma.hbm_to_vmem [thread:$0]  %s3, 24576, %s64, [#allocation12], 512, 512, 32
    $region17: #{tpu_custom_call.1} parent=1 // pred_fallthru
      _
    // Predicated region
    $region18: #{tpu_custom_call.1} parent=1 // pred_check
      _
    $region19: #{tpu_custom_call.1} parent=1 // pred_check_branch
      %71 = sbr.rel (0) target = $region21
    $region20: #{tpu_custom_call.1} parent=1 // pred_region
      _
    $region21: #{tpu_custom_call.1} parent=1 // pred_fallthru
      _
    // Predicated region
    $region22: #{tpu_custom_call.1} parent=1 // pred_check
      _
    $region23: #{tpu_custom_call.1} parent=1 // pred_check_branch
      %73 = sbr.rel (0) target = $region25
    $region24: #{tpu_custom_call.1} parent=1 // pred_region
      %s75 = ssub.s32 2048, 2048
      %76 = vsyncadd [#allocation12], %s75
      %s77 = sshll.u32 [#allocation13], 4
      %s78 = int_to_ptr.vmem [resolvable:$true] %s77
      %83 = dma.hbm_to_vmem [thread:$0]  %s5, 2048, %s78, [#allocation12], 128, 128, 8
    $region25: #{tpu_custom_call.1} parent=1 // pred_fallthru
      _
    // Predicated region
    $region26: #{tpu_custom_call.1} parent=1 // pred_check
      _
    $region27: #{tpu_custom_call.1} parent=1 // pred_check_branch
      %85 = sbr.rel (0) target = $region29
    $region28: #{tpu_custom_call.1} parent=1 // pred_region
      %s87 = ssub.s32 4096, 4096
      %88 = vsyncadd [#allocation15], %s87
      %s89 = sshll.u32 [#allocation14], 4
      %s90 = int_to_ptr.vmem [resolvable:$true] %s89
      %95 = dma.hbm_to_vmem [thread:$0]  %s6, 4096, %s90, [#allocation15], 128, 128, 8
    $region29: #{tpu_custom_call.1} parent=1 // pred_fallthru
      _
    // Predicated region
    $region30: #{tpu_custom_call.1} parent=1 // pred_check
      _
    $region31: #{tpu_custom_call.1} parent=1 // pred_check_branch
      %97 = sbr.rel (0) target = $region33
    $region32: #{tpu_custom_call.1} parent=1 // pred_region
      _
    $region33: #{tpu_custom_call.1} parent=1 // pred_fallthru
      _
    // Predicated region
    $region34: #{tpu_custom_call.1} parent=1 // pred_check
      _
    $region35: #{tpu_custom_call.1} parent=1 // pred_check_branch
      %99 = sbr.rel (0) target = $region37
    $region36: #{tpu_custom_call.1} parent=1 // pred_region
      %100 = dma.done [#allocation6], 128
    $region37: #{tpu_custom_call.1} parent=1 // pred_fallthru
      _
    // Predicated region
    $region38: #{tpu_custom_call.1} parent=1 // pred_check
      _
    $region39: #{tpu_custom_call.1} parent=1 // pred_check_branch
      %102 = sbr.rel (0) target = $region41
    $region40: #{tpu_custom_call.1} parent=1 // pred_region
      %103 = dma.done [#allocation9], 1024
    $region41: #{tpu_custom_call.1} parent=1 // pred_fallthru
      _
    // Predicated region
    $region42: #{tpu_custom_call.1} parent=1 // pred_check
      _
    $region43: #{tpu_custom_call.1} parent=1 // pred_check_branch
      %105 = sbr.rel (0) target = $region45
    $region44: #{tpu_custom_call.1} parent=1 // pred_region
      %106 = dma.done [#allocation9], 384
    $region45: #{tpu_custom_call.1} parent=1 // pred_fallthru
      _
    // Predicated region
    $region46: #{tpu_custom_call.1} parent=1 // pred_check
      _
    $region47: #{tpu_custom_call.1} parent=1 // pred_check_branch
      %108 = sbr.rel (0) target = $region49
    $region48: #{tpu_custom_call.1} parent=1 // pred_region
      %109 = dma.done [#allocation12], 24576
    $region49: #{tpu_custom_call.1} parent=1 // pred_fallthru
      _
    // Predicated region
    $region50: #{tpu_custom_call.1} parent=1 // pred_check
      _
    $region51: #{tpu_custom_call.1} parent=1 // pred_check_branch
      %111 = sbr.rel (0) target = $region53
    $region52: #{tpu_custom_call.1} parent=1 // pred_region
      %112 = dma.done [#allocation12], 2048
    $region53: #{tpu_custom_call.1} parent=1 // pred_fallthru
      _
    // Predicated region
    $region54: #{tpu_custom_call.1} parent=1 // pred_check
      _
    $region55: #{tpu_custom_call.1} parent=1 // pred_check_branch
      %114 = sbr.rel (0) target = $region57
    $region56: #{tpu_custom_call.1} parent=1 // pred_region
      %115 = dma.done [#allocation15], 4096
    $region57: #{tpu_custom_call.1} parent=1 // pred_fallthru
      _
    %p116 = scmp.eq.s32.totalorder 0, 0
    // Predicated region
    $region58: #{tpu_custom_call.1} parent=1 // pred_check
      %p117 = pneg %p116
    $region59: #{tpu_custom_call.1} parent=1 // pred_check_branch
      %119 = sbr.rel (%p117) target = $region61
    $region60: #{tpu_custom_call.1} parent=1 // pred_region
      %v120 = vld [vmem:[#allocation10] sm:$0xff]
      %121 = vst [vmem:[#allocation2] sm:$0xff] %v120
      %s122 = scalar_lea.vmem [#allocation10], 8
      %v123 = vld [vmem:[%s122] sm:$0xff]
      %124 = vst [vmem:[#allocation3] sm:$0xff] %v123
      %s125 = scalar_lea.vmem [#allocation10], 16
      %v126 = vld [vmem:[%s125] sm:$0xff]
      %127 = vst [vmem:[#allocation4] sm:$0xff] %v126
    $region61: #{tpu_custom_call.1} parent=1 // pred_fallthru
      _
    %v128 = vld [vmem:[#allocation8] sm:$0xff]
    %v129 = vld [vmem:[#allocation8 + $0x8] sm:$0xff]
    %v130 = vld [vmem:[#allocation8 + $0x10] sm:$0xff]
    %v131 = vld [vmem:[#allocation8 + $0x18] sm:$0xff]
    %v132 = vld [vmem:[#allocation8 + $0x20] sm:$0xff]
    %v133 = vld [vmem:[#allocation8 + $0x28] sm:$0xff]
    %v134 = vld [vmem:[#allocation8 + $0x30] sm:$0xff]
    %v135 = vld [vmem:[#allocation8 + $0x38] sm:$0xff]
    %v136 = vld [vmem:[#allocation11] sm:$0xff]
    %v137 = vld [vmem:[#allocation11 + $0x8] sm:$0xff]
    %v138 = vld [vmem:[#allocation11 + $0x10] sm:$0xff]
    %v139 = vld [vmem:[#allocation11 + $0x18] sm:$0xff]
    %v140 = vld [vmem:[#allocation11 + $0x20] sm:$0xff]
    %v141 = vld [vmem:[#allocation11 + $0x28] sm:$0xff]
    %v142 = vld [vmem:[#allocation11 + $0x30] sm:$0xff]
    %v143 = vld [vmem:[#allocation11 + $0x38] sm:$0xff]
    %v144 = vld [vmem:[#allocation11 + $0x40] sm:$0xff]
    %v145 = vld [vmem:[#allocation11 + $0x48] sm:$0xff]
    %v146 = vld [vmem:[#allocation11 + $0x50] sm:$0xff]
    %v147 = vld [vmem:[#allocation11 + $0x58] sm:$0xff]
    %v148 = vld [vmem:[#allocation11 + $0x60] sm:$0xff]
    %v149 = vld [vmem:[#allocation11 + $0x68] sm:$0xff]
    %v150 = vld [vmem:[#allocation11 + $0x70] sm:$0xff]
    %v151 = vld [vmem:[#allocation11 + $0x78] sm:$0xff]
    %v152 = vld [vmem:[#allocation11 + $0x80] sm:$0xff]
    %v153 = vld [vmem:[#allocation11 + $0x88] sm:$0xff]
    %v154 = vld [vmem:[#allocation11 + $0x90] sm:$0xff]
    %v155 = vld [vmem:[#allocation11 + $0x98] sm:$0xff]
    %v156 = vld [vmem:[#allocation11 + $0xa0] sm:$0xff]
    %v157 = vld [vmem:[#allocation11 + $0xa8] sm:$0xff]
    %v158 = vld [vmem:[#allocation11 + $0xb0] sm:$0xff]
    %v159 = vld [vmem:[#allocation11 + $0xb8] sm:$0xff]
    %v160 = vld [vmem:[#allocation11 + $0xc0] sm:$0xff]
    %v161 = vld [vmem:[#allocation11 + $0xc8] sm:$0xff]
    %v162 = vld [vmem:[#allocation11 + $0xd0] sm:$0xff]
    %v163 = vld [vmem:[#allocation11 + $0xd8] sm:$0xff]
    %v164 = vld [vmem:[#allocation11 + $0xe0] sm:$0xff]
    %v165 = vld [vmem:[#allocation11 + $0xe8] sm:$0xff]
    %v166 = vld [vmem:[#allocation11 + $0xf0] sm:$0xff]
    %v167 = vld [vmem:[#allocation11 + $0xf8] sm:$0xff]
    %v168 = vld [vmem:[#allocation11 + $0x100] sm:$0xff]
    %v169 = vld [vmem:[#allocation11 + $0x108] sm:$0xff]
    %v170 = vld [vmem:[#allocation11 + $0x110] sm:$0xff]
    %v171 = vld [vmem:[#allocation11 + $0x118] sm:$0xff]
    %v172 = vld [vmem:[#allocation11 + $0x120] sm:$0xff]
    %v173 = vld [vmem:[#allocation11 + $0x128] sm:$0xff]
    %v174 = vld [vmem:[#allocation11 + $0x130] sm:$0xff]
    %v175 = vld [vmem:[#allocation11 + $0x138] sm:$0xff]
    %v176 = vld [vmem:[#allocation11 + $0x140] sm:$0xff]
    %v177 = vld [vmem:[#allocation11 + $0x148] sm:$0xff]
    %v178 = vld [vmem:[#allocation11 + $0x150] sm:$0xff]
    %v179 = vld [vmem:[#allocation11 + $0x158] sm:$0xff]
    %v180 = vld [vmem:[#allocation11 + $0x160] sm:$0xff]
    %v181 = vld [vmem:[#allocation11 + $0x168] sm:$0xff]
    %v182 = vld [vmem:[#allocation11 + $0x170] sm:$0xff]
    %v183 = vld [vmem:[#allocation11 + $0x178] sm:$0xff]
    %v184 = vld [vmem:[#allocation11 + $0x180] sm:$0xff]
    %v185 = vld [vmem:[#allocation11 + $0x188] sm:$0xff]
    %v186 = vld [vmem:[#allocation11 + $0x190] sm:$0xff]
    %v187 = vld [vmem:[#allocation11 + $0x198] sm:$0xff]
    %v188 = vld [vmem:[#allocation11 + $0x1a0] sm:$0xff]
    %v189 = vld [vmem:[#allocation11 + $0x1a8] sm:$0xff]
    %v190 = vld [vmem:[#allocation11 + $0x1b0] sm:$0xff]
    %v191 = vld [vmem:[#allocation11 + $0x1b8] sm:$0xff]
    %v192 = vld [vmem:[#allocation11 + $0x1c0] sm:$0xff]
    %v193 = vld [vmem:[#allocation11 + $0x1c8] sm:$0xff]
    %v194 = vld [vmem:[#allocation11 + $0x1d0] sm:$0xff]
    %v195 = vld [vmem:[#allocation11 + $0x1d8] sm:$0xff]
    %v196 = vld [vmem:[#allocation11 + $0x1e0] sm:$0xff]
    %v197 = vld [vmem:[#allocation11 + $0x1e8] sm:$0xff]
    %v198 = vld [vmem:[#allocation11 + $0x1f0] sm:$0xff]
    %v199 = vld [vmem:[#allocation11 + $0x1f8] sm:$0xff]
    %v200 = vld [vmem:[#allocation11 + $0x200] sm:$0xff]
    %v201 = vld [vmem:[#allocation11 + $0x208] sm:$0xff]
    %v202 = vld [vmem:[#allocation11 + $0x210] sm:$0xff]
    %v203 = vld [vmem:[#allocation11 + $0x218] sm:$0xff]
    %v204 = vld [vmem:[#allocation11 + $0x220] sm:$0xff]
    %v205 = vld [vmem:[#allocation11 + $0x228] sm:$0xff]
    %v206 = vld [vmem:[#allocation11 + $0x230] sm:$0xff]
    %v207 = vld [vmem:[#allocation11 + $0x238] sm:$0xff]
    %v208 = vld [vmem:[#allocation11 + $0x240] sm:$0xff]
    %v209 = vld [vmem:[#allocation11 + $0x248] sm:$0xff]
    %v210 = vld [vmem:[#allocation11 + $0x250] sm:$0xff]
    %v211 = vld [vmem:[#allocation11 + $0x258] sm:$0xff]
    %v212 = vld [vmem:[#allocation11 + $0x260] sm:$0xff]
    %v213 = vld [vmem:[#allocation11 + $0x268] sm:$0xff]
    %v214 = vld [vmem:[#allocation11 + $0x270] sm:$0xff]
    %v215 = vld [vmem:[#allocation11 + $0x278] sm:$0xff]
    %v216 = vld [vmem:[#allocation11 + $0x280] sm:$0xff]
    %v217 = vld [vmem:[#allocation11 + $0x288] sm:$0xff]
    %v218 = vld [vmem:[#allocation11 + $0x290] sm:$0xff]
    %v219 = vld [vmem:[#allocation11 + $0x298] sm:$0xff]
    %v220 = vld [vmem:[#allocation11 + $0x2a0] sm:$0xff]
    %v221 = vld [vmem:[#allocation11 + $0x2a8] sm:$0xff]
    %v222 = vld [vmem:[#allocation11 + $0x2b0] sm:$0xff]
    %v223 = vld [vmem:[#allocation11 + $0x2b8] sm:$0xff]
    %v224 = vld [vmem:[#allocation11 + $0x2c0] sm:$0xff]
    %v225 = vld [vmem:[#allocation11 + $0x2c8] sm:$0xff]
    %v226 = vld [vmem:[#allocation11 + $0x2d0] sm:$0xff]
    %v227 = vld [vmem:[#allocation11 + $0x2d8] sm:$0xff]
    %v228 = vld [vmem:[#allocation11 + $0x2e0] sm:$0xff]
    %v229 = vld [vmem:[#allocation11 + $0x2e8] sm:$0xff]
    %v230 = vld [vmem:[#allocation11 + $0x2f0] sm:$0xff]
    %v231 = vld [vmem:[#allocation11 + $0x2f8] sm:$0xff]
    %v232 = vld [vmem:[#allocation11 + $0x300] sm:$0xff]
    %v233 = vld [vmem:[#allocation11 + $0x308] sm:$0xff]
    %v234 = vld [vmem:[#allocation11 + $0x310] sm:$0xff]
    %v235 = vld [vmem:[#allocation11 + $0x318] sm:$0xff]
    %v236 = vld [vmem:[#allocation11 + $0x320] sm:$0xff]
    %v237 = vld [vmem:[#allocation11 + $0x328] sm:$0xff]
    %v238 = vld [vmem:[#allocation11 + $0x330] sm:$0xff]
    %v239 = vld [vmem:[#allocation11 + $0x338] sm:$0xff]
    %v240 = vld [vmem:[#allocation11 + $0x340] sm:$0xff]
    %v241 = vld [vmem:[#allocation11 + $0x348] sm:$0xff]
    %v242 = vld [vmem:[#allocation11 + $0x350] sm:$0xff]
    %v243 = vld [vmem:[#allocation11 + $0x358] sm:$0xff]
    %v244 = vld [vmem:[#allocation11 + $0x360] sm:$0xff]
    %v245 = vld [vmem:[#allocation11 + $0x368] sm:$0xff]
    %v246 = vld [vmem:[#allocation11 + $0x370] sm:$0xff]
    %v247 = vld [vmem:[#allocation11 + $0x378] sm:$0xff]
    %v248 = vld [vmem:[#allocation11 + $0x380] sm:$0xff]
    %v249 = vld [vmem:[#allocation11 + $0x388] sm:$0xff]
    %v250 = vld [vmem:[#allocation11 + $0x390] sm:$0xff]
    %v251 = vld [vmem:[#allocation11 + $0x398] sm:$0xff]
    %v252 = vld [vmem:[#allocation11 + $0x3a0] sm:$0xff]
    %v253 = vld [vmem:[#allocation11 + $0x3a8] sm:$0xff]
    %v254 = vld [vmem:[#allocation11 + $0x3b0] sm:$0xff]
    %v255 = vld [vmem:[#allocation11 + $0x3b8] sm:$0xff]
    %v256 = vld [vmem:[#allocation11 + $0x3c0] sm:$0xff]
    %v257 = vld [vmem:[#allocation11 + $0x3c8] sm:$0xff]
    %v258 = vld [vmem:[#allocation11 + $0x3d0] sm:$0xff]
    %v259 = vld [vmem:[#allocation11 + $0x3d8] sm:$0xff]
    %v260 = vld [vmem:[#allocation11 + $0x3e0] sm:$0xff]
    %v261 = vld [vmem:[#allocation11 + $0x3e8] sm:$0xff]
    %v262 = vld [vmem:[#allocation11 + $0x3f0] sm:$0xff]
    %v263 = vld [vmem:[#allocation11 + $0x3f8] sm:$0xff]
    %v264 = vld [vmem:[#allocation11 + $0x400] sm:$0xff]
    %v265 = vld [vmem:[#allocation11 + $0x408] sm:$0xff]
    %v266 = vld [vmem:[#allocation11 + $0x410] sm:$0xff]
    %v267 = vld [vmem:[#allocation11 + $0x418] sm:$0xff]
    %v268 = vld [vmem:[#allocation11 + $0x420] sm:$0xff]
    %v269 = vld [vmem:[#allocation11 + $0x428] sm:$0xff]
    %v270 = vld [vmem:[#allocation11 + $0x430] sm:$0xff]
    %v271 = vld [vmem:[#allocation11 + $0x438] sm:$0xff]
    %v272 = vld [vmem:[#allocation11 + $0x440] sm:$0xff]
    %v273 = vld [vmem:[#allocation11 + $0x448] sm:$0xff]
    %v274 = vld [vmem:[#allocation11 + $0x450] sm:$0xff]
    %v275 = vld [vmem:[#allocation11 + $0x458] sm:$0xff]
    %v276 = vld [vmem:[#allocation11 + $0x460] sm:$0xff]
    %v277 = vld [vmem:[#allocation11 + $0x468] sm:$0xff]
    %v278 = vld [vmem:[#allocation11 + $0x470] sm:$0xff]
    %v279 = vld [vmem:[#allocation11 + $0x478] sm:$0xff]
    %v280 = vld [vmem:[#allocation11 + $0x480] sm:$0xff]
    %v281 = vld [vmem:[#allocation11 + $0x488] sm:$0xff]
    %v282 = vld [vmem:[#allocation11 + $0x490] sm:$0xff]
    %v283 = vld [vmem:[#allocation11 + $0x498] sm:$0xff]
    %v284 = vld [vmem:[#allocation11 + $0x4a0] sm:$0xff]
    %v285 = vld [vmem:[#allocation11 + $0x4a8] sm:$0xff]
    %v286 = vld [vmem:[#allocation11 + $0x4b0] sm:$0xff]
    %v287 = vld [vmem:[#allocation11 + $0x4b8] sm:$0xff]
    %v288 = vld [vmem:[#allocation11 + $0x4c0] sm:$0xff]
    %v289 = vld [vmem:[#allocation11 + $0x4c8] sm:$0xff]
    %v290 = vld [vmem:[#allocation11 + $0x4d0] sm:$0xff]
    %v291 = vld [vmem:[#allocation11 + $0x4d8] sm:$0xff]
    %v292 = vld [vmem:[#allocation11 + $0x4e0] sm:$0xff]
    %v293 = vld [vmem:[#allocation11 + $0x4e8] sm:$0xff]
    %v294 = vld [vmem:[#allocation11 + $0x4f0] sm:$0xff]
    %v295 = vld [vmem:[#allocation11 + $0x4f8] sm:$0xff]
    %v296 = vld [vmem:[#allocation11 + $0x500] sm:$0xff]
    %v297 = vld [vmem:[#allocation11 + $0x508] sm:$0xff]
    %v298 = vld [vmem:[#allocation11 + $0x510] sm:$0xff]
    %v299 = vld [vmem:[#allocation11 + $0x518] sm:$0xff]
    %v300 = vld [vmem:[#allocation11 + $0x520] sm:$0xff]
    %v301 = vld [vmem:[#allocation11 + $0x528] sm:$0xff]
    %v302 = vld [vmem:[#allocation11 + $0x530] sm:$0xff]
    %v303 = vld [vmem:[#allocation11 + $0x538] sm:$0xff]
    %v304 = vld [vmem:[#allocation11 + $0x540] sm:$0xff]
    %v305 = vld [vmem:[#allocation11 + $0x548] sm:$0xff]
    %v306 = vld [vmem:[#allocation11 + $0x550] sm:$0xff]
    %v307 = vld [vmem:[#allocation11 + $0x558] sm:$0xff]
    %v308 = vld [vmem:[#allocation11 + $0x560] sm:$0xff]
    %v309 = vld [vmem:[#allocation11 + $0x568] sm:$0xff]
    %v310 = vld [vmem:[#allocation11 + $0x570] sm:$0xff]
    %v311 = vld [vmem:[#allocation11 + $0x578] sm:$0xff]
    %v312 = vld [vmem:[#allocation11 + $0x580] sm:$0xff]
    %v313 = vld [vmem:[#allocation11 + $0x588] sm:$0xff]
    %v314 = vld [vmem:[#allocation11 + $0x590] sm:$0xff]
    %v315 = vld [vmem:[#allocation11 + $0x598] sm:$0xff]
    %v316 = vld [vmem:[#allocation11 + $0x5a0] sm:$0xff]
    %v317 = vld [vmem:[#allocation11 + $0x5a8] sm:$0xff]
    %v318 = vld [vmem:[#allocation11 + $0x5b0] sm:$0xff]
    %v319 = vld [vmem:[#allocation11 + $0x5b8] sm:$0xff]
    %v320 = vld [vmem:[#allocation11 + $0x5c0] sm:$0xff]
    %v321 = vld [vmem:[#allocation11 + $0x5c8] sm:$0xff]
    %v322 = vld [vmem:[#allocation11 + $0x5d0] sm:$0xff]
    %v323 = vld [vmem:[#allocation11 + $0x5d8] sm:$0xff]
    %v324 = vld [vmem:[#allocation11 + $0x5e0] sm:$0xff]
    %v325 = vld [vmem:[#allocation11 + $0x5e8] sm:$0xff]
    %v326 = vld [vmem:[#allocation11 + $0x5f0] sm:$0xff]
    %v327 = vld [vmem:[#allocation11 + $0x5f8] sm:$0xff]
    %v328 = vld [vmem:[%s4] sm:$0xf]
    %v329 = vld [vmem:[#allocation13] sm:$0xff]
    %v330 = vld [vmem:[#allocation13 + $0x8] sm:$0xff]
    %v331 = vld [vmem:[#allocation13 + $0x10] sm:$0xff]
    %v332 = vld [vmem:[#allocation13 + $0x18] sm:$0xff]
    %v333 = vld [vmem:[#allocation13 + $0x20] sm:$0xff]
    %v334 = vld [vmem:[#allocation13 + $0x28] sm:$0xff]
    %v335 = vld [vmem:[#allocation13 + $0x30] sm:$0xff]
    %v336 = vld [vmem:[#allocation13 + $0x38] sm:$0xff]
    %v337 = vld [vmem:[#allocation13 + $0x40] sm:$0xff]
    %v338 = vld [vmem:[#allocation13 + $0x48] sm:$0xff]
    %v339 = vld [vmem:[#allocation13 + $0x50] sm:$0xff]
    %v340 = vld [vmem:[#allocation13 + $0x58] sm:$0xff]
    %v341 = vld [vmem:[#allocation13 + $0x60] sm:$0xff]
    %v342 = vld [vmem:[#allocation13 + $0x68] sm:$0xff]
    %v343 = vld [vmem:[#allocation13 + $0x70] sm:$0xff]
    %v344 = vld [vmem:[#allocation13 + $0x78] sm:$0xff]
    %v345 = vld [vmem:[#allocation14] sm:$0xff]
    %v346 = vld [vmem:[#allocation14 + $0x8] sm:$0xff]
    %v347 = vld [vmem:[#allocation14 + $0x10] sm:$0xff]
    %v348 = vld [vmem:[#allocation14 + $0x18] sm:$0xff]
    %v349 = vld [vmem:[#allocation14 + $0x20] sm:$0xff]
    %v350 = vld [vmem:[#allocation14 + $0x28] sm:$0xff]
    %v351 = vld [vmem:[#allocation14 + $0x30] sm:$0xff]
    %v352 = vld [vmem:[#allocation14 + $0x38] sm:$0xff]
    %v353 = vld [vmem:[#allocation14 + $0x40] sm:$0xff]
    %v354 = vld [vmem:[#allocation14 + $0x48] sm:$0xff]
    %v355 = vld [vmem:[#allocation14 + $0x50] sm:$0xff]
    %v356 = vld [vmem:[#allocation14 + $0x58] sm:$0xff]
    %v357 = vld [vmem:[#allocation14 + $0x60] sm:$0xff]
    %v358 = vld [vmem:[#allocation14 + $0x68] sm:$0xff]
    %v359 = vld [vmem:[#allocation14 + $0x70] sm:$0xff]
    %v360 = vld [vmem:[#allocation14 + $0x78] sm:$0xff]
    %v361 = vld [vmem:[#allocation14 + $0x80] sm:$0xff]
    %v362 = vld [vmem:[#allocation14 + $0x88] sm:$0xff]
    %v363 = vld [vmem:[#allocation14 + $0x90] sm:$0xff]
    %v364 = vld [vmem:[#allocation14 + $0x98] sm:$0xff]
    %v365 = vld [vmem:[#allocation14 + $0xa0] sm:$0xff]
    %v366 = vld [vmem:[#allocation14 + $0xa8] sm:$0xff]
    %v367 = vld [vmem:[#allocation14 + $0xb0] sm:$0xff]
    %v368 = vld [vmem:[#allocation14 + $0xb8] sm:$0xff]
    %v369 = vld [vmem:[#allocation14 + $0xc0] sm:$0xff]
    %v370 = vld [vmem:[#allocation14 + $0xc8] sm:$0xff]
    %v371 = vld [vmem:[#allocation14 + $0xd0] sm:$0xff]
    %v372 = vld [vmem:[#allocation14 + $0xd8] sm:$0xff]
    %v373 = vld [vmem:[#allocation14 + $0xe0] sm:$0xff]
    %v374 = vld [vmem:[#allocation14 + $0xe8] sm:$0xff]
    %v375 = vld [vmem:[#allocation14 + $0xf0] sm:$0xff]
    %v376 = vld [vmem:[#allocation14 + $0xf8] sm:$0xff]
    %v377 = vld [vmem:[%s7] sm:$0x1]
    %v378 = vld [vmem:[#allocation2] sm:$0xff]
    %v379 = vld [vmem:[#allocation3] sm:$0xff]
    %v380 = vld [vmem:[#allocation4] sm:$0xff]
    %v381 = vld [vmem:[#allocation5] sm:$0xff]
    %v383 = vlaneseq
    %v384 = vshrl.u32 %v383, 7
    %v385 = vsub.s32 0, %v384
    %v386 = vrot.slane %v328, %v385
    %v387 = vlaneseq
    %v388 = vshrl.u32 %v387, 7
    %v389 = vsub.s32 1, %v388
    %v390 = vrot.slane %v328, %v389
    %v391 = vlaneseq
    %v392 = vshrl.u32 %v391, 7
    %v393 = vsub.s32 2, %v392
    %v394 = vrot.slane %v328, %v393
    %v395 = vlaneseq
    %v396 = vshrl.u32 %v395, 7
    %v397 = vsub.s32 3, %v396
    %v398 = vrot.slane %v328, %v397
    %403 = vmatprep.subr.mxu0 %v137
    %404 = vmatpush1.msra.mxu0 %v136
    %405 = vmatprep.subr.mxu0 %v141
    %406 = vmatpush1.msra.mxu0 %v140
    %407 = vmatprep.subr.mxu0 %v145
    %408 = vmatpush1.msra.mxu0 %v144
    %409 = vmatprep.subr.mxu0 %v149
    %410 = vmatpush1.msra.mxu0 %v148
    %411 = vmatprep.subr.mxu0 %v153
    %412 = vmatpush1.msra.mxu0 %v152
    %413 = vmatprep.subr.mxu0 %v157
    %414 = vmatpush1.msra.mxu0 %v156
    %415 = vmatprep.subr.mxu0 %v161
    %416 = vmatpush1.msra.mxu0 %v160
    %417 = vmatprep.subr.mxu0 %v165
    %418 = vmatpush1.msra.mxu0 %v164
    %419 = vmatprep.subr.mxu0 %v169
    %420 = vmatpush1.msra.mxu0 %v168
    %421 = vmatprep.subr.mxu0 %v173
    %422 = vmatpush1.msra.mxu0 %v172
    %423 = vmatprep.subr.mxu0 %v177
    %424 = vmatpush1.msra.mxu0 %v176
    %425 = vmatprep.subr.mxu0 %v181
    %426 = vmatpush1.msra.mxu0 %v180
    %427 = vmatprep.subr.mxu0 %v185
    %428 = vmatpush1.msra.mxu0 %v184
    %429 = vmatprep.subr.mxu0 %v189
    %430 = vmatpush1.msra.mxu0 %v188
    %431 = vmatprep.subr.mxu0 %v193
    %432 = vmatpush1.msra.mxu0 %v192
    %433 = vmatprep.subr.mxu0 %v197
    %434 = vmatpush1.msra.mxu0 %v196
    %435 = vmatprep.subr.mxu0 %v201
    %436 = vmatpush1.msra.mxu0 %v200
    %437 = vmatprep.subr.mxu0 %v205
    %438 = vmatpush1.msra.mxu0 %v204
    %439 = vmatprep.subr.mxu0 %v209
    %440 = vmatpush1.msra.mxu0 %v208
    %441 = vmatprep.subr.mxu0 %v213
    %442 = vmatpush1.msra.mxu0 %v212
    %443 = vmatprep.subr.mxu0 %v217
    %444 = vmatpush1.msra.mxu0 %v216
    %445 = vmatprep.subr.mxu0 %v221
    %446 = vmatpush1.msra.mxu0 %v220
    %447 = vmatprep.subr.mxu0 %v225
    %448 = vmatpush1.msra.mxu0 %v224
    %449 = vmatprep.subr.mxu0 %v229
    %450 = vmatpush1.msra.mxu0 %v228
    %451 = vmatprep.subr.mxu0 %v233
    %452 = vmatpush1.msra.mxu0 %v232
    %453 = vmatprep.subr.mxu0 %v237
    %454 = vmatpush1.msra.mxu0 %v236
    %455 = vmatprep.subr.mxu0 %v241
    %456 = vmatpush1.msra.mxu0 %v240
    %457 = vmatprep.subr.mxu0 %v245
    %458 = vmatpush1.msra.mxu0 %v244
    %459 = vmatprep.subr.mxu0 %v249
    %460 = vmatpush1.msra.mxu0 %v248
    %461 = vmatprep.subr.mxu0 %v253
    %462 = vmatpush1.msra.mxu0 %v252
    %463 = vmatprep.subr.mxu0 %v257
    %464 = vmatpush1.msra.mxu0 %v256
    %465 = vmatprep.subr.mxu0 %v261
    %466 = vmatpush1.msra.mxu0 %v260
    %467 = vmatprep.mubr.f32.mxu0 %v380
    %468 = vmatmul.mubr.f32.gmra.mrb[0].mxu0 %v381
    %v469 = vpop.f32.mrb[0].mxu0
    %v470 = vadd.f32 %v386, %v469
    %v471 = vpop.f32.mrb[0].mxu0
    %v472 = vadd.f32 %v390, %v471
    %473 = vdwg.mxu0
    %474 = vmatprep.subr.mxu0 %v265
    %475 = vmatpush1.msra.mxu0 %v264
    %476 = vmatprep.subr.mxu0 %v269
    %477 = vmatpush1.msra.mxu0 %v268
    %478 = vmatprep.subr.mxu0 %v273
    %479 = vmatpush1.msra.mxu0 %v272
    %480 = vmatprep.subr.mxu0 %v277
    %481 = vmatpush1.msra.mxu0 %v276
    %482 = vmatprep.subr.mxu0 %v281
    %483 = vmatpush1.msra.mxu0 %v280
    %484 = vmatprep.subr.mxu0 %v285
    %485 = vmatpush1.msra.mxu0 %v284
    %486 = vmatprep.subr.mxu0 %v289
    %487 = vmatpush1.msra.mxu0 %v288
    %488 = vmatprep.subr.mxu0 %v293
    %489 = vmatpush1.msra.mxu0 %v292
    %490 = vmatprep.subr.mxu0 %v297
    %491 = vmatpush1.msra.mxu0 %v296
    %492 = vmatprep.subr.mxu0 %v301
    %493 = vmatpush1.msra.mxu0 %v300
    %494 = vmatprep.subr.mxu0 %v305
    %495 = vmatpush1.msra.mxu0 %v304
    %496 = vmatprep.subr.mxu0 %v309
    %497 = vmatpush1.msra.mxu0 %v308
    %498 = vmatprep.subr.mxu0 %v313
    %499 = vmatpush1.msra.mxu0 %v312
    %500 = vmatprep.subr.mxu0 %v317
    %501 = vmatpush1.msra.mxu0 %v316
    %502 = vmatprep.subr.mxu0 %v321
    %503 = vmatpush1.msra.mxu0 %v320
    %504 = vmatprep.subr.mxu0 %v325
    %505 = vmatpush1.msra.mxu0 %v324
    %506 = vmatprep.subr.mxu0 0.0
    %507 = vmatpush1.msra.mxu0 0.0
    %508 = vmatprep.subr.mxu0 0.0
    %509 = vmatpush1.msra.mxu0 0.0
    %510 = vmatprep.subr.mxu0 0.0
    %511 = vmatpush1.msra.mxu0 0.0
    %512 = vmatprep.subr.mxu0 0.0
    %513 = vmatpush1.msra.mxu0 0.0
    %514 = vmatprep.subr.mxu0 0.0
    %515 = vmatpush1.msra.mxu0 0.0
    %516 = vmatprep.subr.mxu0 0.0
    %517 = vmatpush1.msra.mxu0 0.0
    %518 = vmatprep.subr.mxu0 0.0
    %519 = vmatpush1.msra.mxu0 0.0
    %520 = vmatprep.subr.mxu0 0.0
    %521 = vmatpush1.msra.mxu0 0.0
    %522 = vmatprep.subr.mxu0 0.0
    %523 = vmatpush1.msra.mxu0 0.0
    %524 = vmatprep.subr.mxu0 0.0
    %525 = vmatpush1.msra.mxu0 0.0
    %526 = vmatprep.subr.mxu0 0.0
    %527 = vmatpush1.msra.mxu0 0.0
    %528 = vmatprep.subr.mxu0 0.0
    %529 = vmatpush1.msra.mxu0 0.0
    %530 = vmatprep.subr.mxu0 0.0
    %531 = vmatpush1.msra.mxu0 0.0
    %532 = vmatprep.subr.mxu0 0.0
    %533 = vmatpush1.msra.mxu0 0.0
    %534 = vmatprep.subr.mxu0 0.0
    %535 = vmatpush1.msra.mxu0 0.0
    %536 = vmatprep.subr.mxu0 0.0
    %537 = vmatpush1.msra.mxu0 0.0
    %538 = vmatprep.mubr.f32.mxu0 0.0
    %539 = vmatmul.mubr.f32.gmra.mrb[0].mxu0 %v378
    %v540 = vpop.f32.mrb[0].mxu0
    %v541 = vadd.f32 %v470, %v540
    %v542 = vpop.f32.mrb[0].mxu0
    %v543 = vadd.f32 %v472, %v542
    %544 = vdwg.mxu0
    %545 = vmatprep.subr.mxu0 %v139
    %546 = vmatpush1.msra.mxu0 %v138
    %547 = vmatprep.subr.mxu0 %v143
    %548 = vmatpush1.msra.mxu0 %v142
    %549 = vmatprep.subr.mxu0 %v147
    %550 = vmatpush1.msra.mxu0 %v146
    %551 = vmatprep.subr.mxu0 %v151
    %552 = vmatpush1.msra.mxu0 %v150
    %553 = vmatprep.subr.mxu0 %v155
    %554 = vmatpush1.msra.mxu0 %v154
    %555 = vmatprep.subr.mxu0 %v159
    %556 = vmatpush1.msra.mxu0 %v158
    %557 = vmatprep.subr.mxu0 %v163
    %558 = vmatpush1.msra.mxu0 %v162
    %559 = vmatprep.subr.mxu0 %v167
    %560 = vmatpush1.msra.mxu0 %v166
    %561 = vmatprep.subr.mxu0 %v171
    %562 = vmatpush1.msra.mxu0 %v170
    %563 = vmatprep.subr.mxu0 %v175
    %564 = vmatpush1.msra.mxu0 %v174
    %565 = vmatprep.subr.mxu0 %v179
    %566 = vmatpush1.msra.mxu0 %v178
    %567 = vmatprep.subr.mxu0 %v183
    %568 = vmatpush1.msra.mxu0 %v182
    %569 = vmatprep.subr.mxu0 %v187
    %570 = vmatpush1.msra.mxu0 %v186
    %571 = vmatprep.subr.mxu0 %v191
    %572 = vmatpush1.msra.mxu0 %v190
    %573 = vmatprep.subr.mxu0 %v195
    %574 = vmatpush1.msra.mxu0 %v194
    %575 = vmatprep.subr.mxu0 %v199
    %576 = vmatpush1.msra.mxu0 %v198
    %577 = vmatprep.subr.mxu0 %v203
    %578 = vmatpush1.msra.mxu0 %v202
    %579 = vmatprep.subr.mxu0 %v207
    %580 = vmatpush1.msra.mxu0 %v206
    %581 = vmatprep.subr.mxu0 %v211
    %582 = vmatpush1.msra.mxu0 %v210
    %583 = vmatprep.subr.mxu0 %v215
    %584 = vmatpush1.msra.mxu0 %v214
    %585 = vmatprep.subr.mxu0 %v219
    %586 = vmatpush1.msra.mxu0 %v218
    %587 = vmatprep.subr.mxu0 %v223
    %588 = vmatpush1.msra.mxu0 %v222
    %589 = vmatprep.subr.mxu0 %v227
    %590 = vmatpush1.msra.mxu0 %v226
    %591 = vmatprep.subr.mxu0 %v231
    %592 = vmatpush1.msra.mxu0 %v230
    %593 = vmatprep.subr.mxu0 %v235
    %594 = vmatpush1.msra.mxu0 %v234
    %595 = vmatprep.subr.mxu0 %v239
    %596 = vmatpush1.msra.mxu0 %v238
    %597 = vmatprep.subr.mxu0 %v243
    %598 = vmatpush1.msra.mxu0 %v242
    %599 = vmatprep.subr.mxu0 %v247
    %600 = vmatpush1.msra.mxu0 %v246
    %601 = vmatprep.subr.mxu0 %v251
    %602 = vmatpush1.msra.mxu0 %v250
    %603 = vmatprep.subr.mxu0 %v255
    %604 = vmatpush1.msra.mxu0 %v254
    %605 = vmatprep.subr.mxu0 %v259
    %606 = vmatpush1.msra.mxu0 %v258
    %607 = vmatprep.subr.mxu0 %v263
    %608 = vmatpush1.msra.mxu0 %v262
    %609 = vmatprep.mubr.f32.mxu0 %v380
    %610 = vmatmul.mubr.f32.gmra.mrb[0].mxu0 %v381
    %v611 = vpop.f32.mrb[0].mxu0
    %v612 = vadd.f32 %v394, %v611
    %v613 = vpop.f32.mrb[0].mxu0
    %v614 = vadd.f32 %v398, %v613
    %615 = vdwg.mxu0
    %616 = vmatprep.subr.mxu0 %v267
    %617 = vmatpush1.msra.mxu0 %v266
    %618 = vmatprep.subr.mxu0 %v271
    %619 = vmatpush1.msra.mxu0 %v270
    %620 = vmatprep.subr.mxu0 %v275
    %621 = vmatpush1.msra.mxu0 %v274
    %622 = vmatprep.subr.mxu0 %v279
    %623 = vmatpush1.msra.mxu0 %v278
    %624 = vmatprep.subr.mxu0 %v283
    %625 = vmatpush1.msra.mxu0 %v282
    %626 = vmatprep.subr.mxu0 %v287
    %627 = vmatpush1.msra.mxu0 %v286
    %628 = vmatprep.subr.mxu0 %v291
    %629 = vmatpush1.msra.mxu0 %v290
    %630 = vmatprep.subr.mxu0 %v295
    %631 = vmatpush1.msra.mxu0 %v294
    %632 = vmatprep.subr.mxu0 %v299
    %633 = vmatpush1.msra.mxu0 %v298
    %634 = vmatprep.subr.mxu0 %v303
    %635 = vmatpush1.msra.mxu0 %v302
    %636 = vmatprep.subr.mxu0 %v307
    %637 = vmatpush1.msra.mxu0 %v306
    %638 = vmatprep.subr.mxu0 %v311
    %639 = vmatpush1.msra.mxu0 %v310
    %640 = vmatprep.subr.mxu0 %v315
    %641 = vmatpush1.msra.mxu0 %v314
    %642 = vmatprep.subr.mxu0 %v319
    %643 = vmatpush1.msra.mxu0 %v318
    %644 = vmatprep.subr.mxu0 %v323
    %645 = vmatpush1.msra.mxu0 %v322
    %646 = vmatprep.subr.mxu0 %v327
    %647 = vmatpush1.msra.mxu0 %v326
    %648 = vmatprep.subr.mxu0 0.0
    %649 = vmatpush1.msra.mxu0 0.0
    %650 = vmatprep.subr.mxu0 0.0
    %651 = vmatpush1.msra.mxu0 0.0
    %652 = vmatprep.subr.mxu0 0.0
    %653 = vmatpush1.msra.mxu0 0.0
    %654 = vmatprep.subr.mxu0 0.0
    %655 = vmatpush1.msra.mxu0 0.0
    %656 = vmatprep.subr.mxu0 0.0
    %657 = vmatpush1.msra.mxu0 0.0
    %658 = vmatprep.subr.mxu0 0.0
    %659 = vmatpush1.msra.mxu0 0.0
    %660 = vmatprep.subr.mxu0 0.0
    %661 = vmatpush1.msra.mxu0 0.0
    %662 = vmatprep.subr.mxu0 0.0
    %663 = vmatpush1.msra.mxu0 0.0
    %664 = vmatprep.subr.mxu0 0.0
    %665 = vmatpush1.msra.mxu0 0.0
    %666 = vmatprep.subr.mxu0 0.0
    %667 = vmatpush1.msra.mxu0 0.0
    %668 = vmatprep.subr.mxu0 0.0
    %669 = vmatpush1.msra.mxu0 0.0
    %670 = vmatprep.subr.mxu0 0.0
    %671 = vmatpush1.msra.mxu0 0.0
    %672 = vmatprep.subr.mxu0 0.0
    %673 = vmatpush1.msra.mxu0 0.0
    %674 = vmatprep.subr.mxu0 0.0
    %675 = vmatpush1.msra.mxu0 0.0
    %676 = vmatprep.subr.mxu0 0.0
    %677 = vmatpush1.msra.mxu0 0.0
    %678 = vmatprep.subr.mxu0 0.0
    %679 = vmatpush1.msra.mxu0 0.0
    %680 = vmatprep.mubr.f32.mxu0 0.0
    %681 = vmatmul.mubr.f32.gmra.mrb[0].mxu0 %v378
    %v682 = vpop.f32.mrb[0].mxu0
    %v683 = vadd.f32 %v612, %v682
    %v684 = vpop.f32.mrb[0].mxu0
    %v685 = vadd.f32 %v614, %v684
    %686 = vdwg.mxu0
    %v687 = vxor.u32 %v541, 2147483648
    %v688 = vmul.f32 %v687, 1.442695
    %v689 = vpow.pop %v688
    %v690 = vadd.f32 %v689, 1.0
    %v691 = vrcp.pop %v690
    %v692 = vmul.f32 1.0, %v691
    %v693 = vxor.u32 %v543, 2147483648
    %v694 = vmul.f32 %v693, 1.442695
    %v695 = vpow.pop %v694
    %v696 = vadd.f32 %v695, 1.0
    %v697 = vrcp.pop %v696
    %v698 = vmul.f32 1.0, %v697
    %v699 = vtanh.pop %v683
    %v700 = vxor.u32 %v685, 2147483648
    %v701 = vmul.f32 %v700, 1.442695
    %v702 = vpow.pop %v701
    %v703 = vadd.f32 %v702, 1.0
    %v704 = vrcp.pop %v703
    %v705 = vmul.f32 1.0, %v704
    %v706 = vmul.f32 %v698, %v379
    %v707 = vmul.f32 %v692, %v699
    %v708 = vadd.f32 %v706, %v707
    %v709 = vtanh.pop %v708
    %v710 = vmul.f32 %v705, %v709
    %711 = vmatprep.subr.mxu0 0.0
    %712 = vmatpush1.msra.mxu0 %v329
    %713 = vmatprep.subr.mxu0 0.0
    %714 = vmatpush1.msra.mxu0 %v330
    %715 = vmatprep.subr.mxu0 0.0
    %716 = vmatpush1.msra.mxu0 %v331
    %717 = vmatprep.subr.mxu0 0.0
    %718 = vmatpush1.msra.mxu0 %v332
    %719 = vmatprep.subr.mxu0 0.0
    %720 = vmatpush1.msra.mxu0 %v333
    %721 = vmatprep.subr.mxu0 0.0
    %722 = vmatpush1.msra.mxu0 %v334
    %723 = vmatprep.subr.mxu0 0.0
    %724 = vmatpush1.msra.mxu0 %v335
    %725 = vmatprep.subr.mxu0 0.0
    %726 = vmatpush1.msra.mxu0 %v336
    %727 = vmatprep.subr.mxu0 0.0
    %728 = vmatpush1.msra.mxu0 %v337
    %729 = vmatprep.subr.mxu0 0.0
    %730 = vmatpush1.msra.mxu0 %v338
    %731 = vmatprep.subr.mxu0 0.0
    %732 = vmatpush1.msra.mxu0 %v339
    %733 = vmatprep.subr.mxu0 0.0
    %734 = vmatpush1.msra.mxu0 %v340
    %735 = vmatprep.subr.mxu0 0.0
    %736 = vmatpush1.msra.mxu0 %v341
    %737 = vmatprep.subr.mxu0 0.0
    %738 = vmatpush1.msra.mxu0 %v342
    %739 = vmatprep.subr.mxu0 0.0
    %740 = vmatpush1.msra.mxu0 %v343
    %741 = vmatprep.subr.mxu0 0.0
    %742 = vmatpush1.msra.mxu0 %v344
    %743 = vmatprep.subr.mxu0 0.0
    %744 = vmatpush1.msra.mxu0 0.0
    %745 = vmatprep.subr.mxu0 0.0
    %746 = vmatpush1.msra.mxu0 0.0
    %747 = vmatprep.subr.mxu0 0.0
    %748 = vmatpush1.msra.mxu0 0.0
    %749 = vmatprep.subr.mxu0 0.0
    %750 = vmatpush1.msra.mxu0 0.0
    %751 = vmatprep.subr.mxu0 0.0
    %752 = vmatpush1.msra.mxu0 0.0
    %753 = vmatprep.subr.mxu0 0.0
    %754 = vmatpush1.msra.mxu0 0.0
    %755 = vmatprep.subr.mxu0 0.0
    %756 = vmatpush1.msra.mxu0 0.0
    %757 = vmatprep.subr.mxu0 0.0
    %758 = vmatpush1.msra.mxu0 0.0
    %759 = vmatprep.subr.mxu0 0.0
    %760 = vmatpush1.msra.mxu0 0.0
    %761 = vmatprep.subr.mxu0 0.0
    %762 = vmatpush1.msra.mxu0 0.0
    %763 = vmatprep.subr.mxu0 0.0
    %764 = vmatpush1.msra.mxu0 0.0
    %765 = vmatprep.subr.mxu0 0.0
    %766 = vmatpush1.msra.mxu0 0.0
    %767 = vmatprep.subr.mxu0 0.0
    %768 = vmatpush1.msra.mxu0 0.0
    %769 = vmatprep.subr.mxu0 0.0
    %770 = vmatpush1.msra.mxu0 0.0
    %771 = vmatprep.subr.mxu0 0.0
    %772 = vmatpush1.msra.mxu0 0.0
    %773 = vmatprep.subr.mxu0 0.0
    %774 = vmatpush1.msra.mxu0 0.0
    %775 = vmatprep.mubr.f32.mxu0 0.0
    %776 = vmatmul.mubr.f32.gmra.mrb[0].mxu0 %v710
    %v777 = vpop.f32.mrb[0].mxu0
    %v778 = vadd.f32 0.0, %v777
    %v779 = vpop.f32.mrb[0].mxu0
    %780 = vdwg.mxu0
    %v782 = vcombine.high %v778, %v778
    %v784 = vunpack.c.l.s4 1966171168
    %v785 = vunpack.c.0.s8 %v784
    %v786 = vlaneseq
    %v787 = vshrl.u32 %v786, 7
    %v788 = vsub.s32 %v785, %v787
    %v789 = vrot.slane %v778, %v788
    %v791 = vunpack.c.l.s4 1966171168
    %v792 = vunpack.c.0.s8 %v791
    %v793 = vlaneseq
    %v794 = vshrl.u32 %v793, 7
    %v795 = vsub.s32 %v792, %v794
    %v796 = vrot.slane %v782, %v795
    %v797 = vcombine.high %v789, %v789
    %v798 = vcombine.high %v796, %v796
    %v800 = vunpack.c.l.s4 1966171168
    %v801 = vunpack.c.0.s8 %v800
    %v802 = vlaneseq
    %v803 = vshrl.u32 %v802, 7
    %v804 = vsub.s32 %v801, %v803
    %v805 = vrot.slane %v789, %v804
    %v807 = vunpack.c.l.s4 1966171168
    %v808 = vunpack.c.0.s8 %v807
    %v809 = vlaneseq
    %v810 = vshrl.u32 %v809, 7
    %v811 = vsub.s32 %v808, %v810
    %v812 = vrot.slane %v796, %v811
    %v814 = vunpack.c.l.s4 1966171168
    %v815 = vunpack.c.0.s8 %v814
    %v816 = vlaneseq
    %v817 = vshrl.u32 %v816, 7
    %v818 = vsub.s32 %v815, %v817
    %v819 = vrot.slane %v797, %v818
    %v821 = vunpack.c.l.s4 1966171168
    %v822 = vunpack.c.0.s8 %v821
    %v823 = vlaneseq
    %v824 = vshrl.u32 %v823, 7
    %v825 = vsub.s32 %v822, %v824
    %v826 = vrot.slane %v798, %v825
    %v827 = vcombine.high %v805, %v805
    %v828 = vcombine.high %v812, %v812
    %v829 = vcombine.high %v819, %v819
    %v830 = vcombine.high %v826, %v826
    %v831 = vlaneseq
    %v832 = vshrl.u32 %v831, 7
    %v833 = vsub.s32 0, %v832
    %v834 = vrot.slane %v805, %v833
    %v835 = vlaneseq
    %v836 = vshrl.u32 %v835, 7
    %v837 = vsub.s32 0, %v836
    %v838 = vrot.slane %v819, %v837
    %v839 = vlaneseq
    %v840 = vshrl.u32 %v839, 7
    %v841 = vsub.s32 0, %v840
    %v842 = vrot.slane %v827, %v841
    %v843 = vlaneseq
    %v844 = vshrl.u32 %v843, 7
    %v845 = vsub.s32 0, %v844
    %v846 = vrot.slane %v829, %v845
    %v847 = vlaneseq
    %v848 = vshrl.u32 %v847, 7
    %v849 = vsub.s32 0, %v848
    %v850 = vrot.slane %v812, %v849
    %v851 = vlaneseq
    %v852 = vshrl.u32 %v851, 7
    %v853 = vsub.s32 0, %v852
    %v854 = vrot.slane %v826, %v853
    %v855 = vlaneseq
    %v856 = vshrl.u32 %v855, 7
    %v857 = vsub.s32 0, %v856
    %v858 = vrot.slane %v828, %v857
    %v859 = vlaneseq
    %v860 = vshrl.u32 %v859, 7
    %v861 = vsub.s32 0, %v860
    %v862 = vrot.slane %v830, %v861
    %v871 = vmul.f32 %v128, %v834
    %v872 = vmul.f32 %v129, %v838
    %v873 = vmul.f32 %v130, %v842
    %v874 = vmul.f32 %v131, %v846
    %v875 = vmul.f32 %v132, %v850
    %v876 = vmul.f32 %v133, %v854
    %v877 = vmul.f32 %v134, %v858
    %v878 = vmul.f32 %v135, %v862
    %879 = vadd.xlane.f32.xlu0 %v871
    %v880 = vpop.xlane.xlu0 %879
    %881 = vadd.xlane.f32.xlu0 %v872
    %v882 = vpop.xlane.xlu0 %881
    %883 = vadd.xlane.f32.xlu0 %v873
    %v884 = vpop.xlane.xlu0 %883
    %885 = vadd.xlane.f32.xlu0 %v874
    %v886 = vpop.xlane.xlu0 %885
    %887 = vadd.xlane.f32.xlu0 %v875
    %v888 = vpop.xlane.xlu0 %887
    %889 = vadd.xlane.f32.xlu0 %v876
    %v890 = vpop.xlane.xlu0 %889
    %891 = vadd.xlane.f32.xlu0 %v877
    %v892 = vpop.xlane.xlu0 %891
    %893 = vadd.xlane.f32.xlu0 %v878
    %v894 = vpop.xlane.xlu0 %893
    %v903 = vlaneseq
    %v904 = vand.u32 %v903, 127
    %v905 = vlaneseq
    %v906 = vshrl.u32 %v905, 7
    %v907 = vsub.s32 %v904, %v906
    %v908 = vrot.slane %v880, %v907
    %v909 = vlaneseq
    %v910 = vshrl.u32 %v909, 7
    %v911 = vsub.s32 %v904, %v910
    %v912 = vrot.slane %v882, %v911
    %v913 = vlaneseq
    %v914 = vshrl.u32 %v913, 7
    %v915 = vsub.s32 %v904, %v914
    %v916 = vrot.slane %v884, %v915
    %v917 = vlaneseq
    %v918 = vshrl.u32 %v917, 7
    %v919 = vsub.s32 %v904, %v918
    %v920 = vrot.slane %v886, %v919
    %v921 = vlaneseq
    %v922 = vshrl.u32 %v921, 7
    %v923 = vsub.s32 %v904, %v922
    %v924 = vrot.slane %v888, %v923
    %v925 = vlaneseq
    %v926 = vshrl.u32 %v925, 7
    %v927 = vsub.s32 %v904, %v926
    %v928 = vrot.slane %v890, %v927
    %v929 = vlaneseq
    %v930 = vshrl.u32 %v929, 7
    %v931 = vsub.s32 %v904, %v930
    %v932 = vrot.slane %v892, %v931
    %v933 = vlaneseq
    %v934 = vshrl.u32 %v933, 7
    %v935 = vsub.s32 %v904, %v934
    %v936 = vrot.slane %v894, %v935
    %vm937 = vcmask 1041409
    %v938 = vsel %vm937, %v912, %v908
    %vm939 = vcmask 1042434
    %v940 = vsel %vm939, %v916, %v938
    %vm941 = vcmask 1043459
    %v942 = vsel %vm941, %v920, %v940
    %vm943 = vcmask 1044484
    %v944 = vsel %vm943, %v924, %v942
    %vm945 = vcmask 1045509
    %v946 = vsel %vm945, %v928, %v944
    %vm947 = vcmask 1046534
    %v948 = vsel %vm947, %v932, %v946
    %vm949 = vcmask 1047559
    %v950 = vsel %vm949, %v936, %v948
    %vm952 = vcmask 64512
    %v953 = vsel %vm952, %v950, -inf
    %954 = vmax.xlane.f32.xlu0 %v953
    %v955 = vpop.xlane.xlu0 %954
    %v957 = vlaneseq
    %v958 = vshrl.u32 %v957, 7
    %v959 = vsub.s32 0, %v958
    %v960 = vrot.slane %v955, %v959
    %v961 = vlaneseq
    %v962 = vshrl.u32 %v961, 7
    %v963 = vsub.s32 1, %v962
    %v964 = vrot.slane %v955, %v963
    %v965 = vlaneseq
    %v966 = vshrl.u32 %v965, 7
    %v967 = vsub.s32 2, %v966
    %v968 = vrot.slane %v955, %v967
    %v969 = vlaneseq
    %v970 = vshrl.u32 %v969, 7
    %v971 = vsub.s32 3, %v970
    %v972 = vrot.slane %v955, %v971
    %v973 = vlaneseq
    %v974 = vshrl.u32 %v973, 7
    %v975 = vsub.s32 4, %v974
    %v976 = vrot.slane %v955, %v975
    %v977 = vlaneseq
    %v978 = vshrl.u32 %v977, 7
    %v979 = vsub.s32 5, %v978
    %v980 = vrot.slane %v955, %v979
    %v981 = vlaneseq
    %v982 = vshrl.u32 %v981, 7
    %v983 = vsub.s32 6, %v982
    %v984 = vrot.slane %v955, %v983
    %v985 = vlaneseq
    %v986 = vshrl.u32 %v985, 7
    %v987 = vsub.s32 7, %v986
    %v988 = vrot.slane %v955, %v987
    %v997 = vsub.f32 %v880, %v960
    %v998 = vsub.f32 %v882, %v964
    %v999 = vsub.f32 %v884, %v968
    %v1000 = vsub.f32 %v886, %v972
    %v1001 = vsub.f32 %v888, %v976
    %v1002 = vsub.f32 %v890, %v980
    %v1003 = vsub.f32 %v892, %v984
    %v1004 = vsub.f32 %v894, %v988
    %v1005 = vmul.f32 %v997, 1.442695
    %v1006 = vpow.pop %v1005
    %v1007 = vmul.f32 %v998, 1.442695
    %v1008 = vpow.pop %v1007
    %v1009 = vmul.f32 %v999, 1.442695
    %v1010 = vpow.pop %v1009
    %v1011 = vmul.f32 %v1000, 1.442695
    %v1012 = vpow.pop %v1011
    %v1013 = vmul.f32 %v1001, 1.442695
    %v1014 = vpow.pop %v1013
    %v1015 = vmul.f32 %v1002, 1.442695
    %v1016 = vpow.pop %v1015
    %v1017 = vmul.f32 %v1003, 1.442695
    %v1018 = vpow.pop %v1017
    %v1019 = vmul.f32 %v1004, 1.442695
    %v1020 = vpow.pop %v1019
    %1029 = vset.pattern.permute.xlu0 0
    %1030 = vperm.xlu0 %1029, %v1006
    %v1031 = vpop.permute.xlu0 %1030
    %1032 = vset.pattern.permute.xlu0 0
    %1033 = vperm.xlu0 %1032, %v1008
    %v1034 = vpop.permute.xlu0 %1033
    %1035 = vset.pattern.permute.xlu0 0
    %1036 = vperm.xlu0 %1035, %v1010
    %v1037 = vpop.permute.xlu0 %1036
    %1038 = vset.pattern.permute.xlu0 0
    %1039 = vperm.xlu0 %1038, %v1012
    %v1040 = vpop.permute.xlu0 %1039
    %1041 = vset.pattern.permute.xlu0 0
    %1042 = vperm.xlu0 %1041, %v1014
    %v1043 = vpop.permute.xlu0 %1042
    %1044 = vset.pattern.permute.xlu0 0
    %1045 = vperm.xlu0 %1044, %v1016
    %v1046 = vpop.permute.xlu0 %1045
    %1047 = vset.pattern.permute.xlu0 0
    %1048 = vperm.xlu0 %1047, %v1018
    %v1049 = vpop.permute.xlu0 %1048
    %1050 = vset.pattern.permute.xlu0 0
    %1051 = vperm.xlu0 %1050, %v1020
    %v1052 = vpop.permute.xlu0 %1051
    %v1053 = vlaneseq
    %v1054 = vshrl.u32 %v1053, 7
    %v1055 = vsub.s32 %v904, %v1054
    %v1056 = vrot.slane %v1031, %v1055
    %v1057 = vlaneseq
    %v1058 = vshrl.u32 %v1057, 7
    %v1059 = vsub.s32 %v904, %v1058
    %v1060 = vrot.slane %v1034, %v1059
    %v1061 = vlaneseq
    %v1062 = vshrl.u32 %v1061, 7
    %v1063 = vsub.s32 %v904, %v1062
    %v1064 = vrot.slane %v1037, %v1063
    %v1065 = vlaneseq
    %v1066 = vshrl.u32 %v1065, 7
    %v1067 = vsub.s32 %v904, %v1066
    %v1068 = vrot.slane %v1040, %v1067
    %v1069 = vlaneseq
    %v1070 = vshrl.u32 %v1069, 7
    %v1071 = vsub.s32 %v904, %v1070
    %v1072 = vrot.slane %v1043, %v1071
    %v1073 = vlaneseq
    %v1074 = vshrl.u32 %v1073, 7
    %v1075 = vsub.s32 %v904, %v1074
    %v1076 = vrot.slane %v1046, %v1075
    %v1077 = vlaneseq
    %v1078 = vshrl.u32 %v1077, 7
    %v1079 = vsub.s32 %v904, %v1078
    %v1080 = vrot.slane %v1049, %v1079
    %v1081 = vlaneseq
    %v1082 = vshrl.u32 %v1081, 7
    %v1083 = vsub.s32 %v904, %v1082
    %v1084 = vrot.slane %v1052, %v1083
    %v1085 = vsel %vm937, %v1060, %v1056
    %v1086 = vsel %vm939, %v1064, %v1085
    %v1087 = vsel %vm941, %v1068, %v1086
    %v1088 = vsel %vm943, %v1072, %v1087
    %v1089 = vsel %vm945, %v1076, %v1088
    %v1090 = vsel %vm947, %v1080, %v1089
    %v1091 = vsel %vm949, %v1084, %v1090
    %v1093 = vsel %vm952, %v1091, 0.0
    %1094 = vadd.xlane.f32.xlu0 %v1093
    %v1095 = vpop.xlane.xlu0 %1094
    %v1096 = vrcp.pop %v1095
    %v1098 = vlaneseq
    %v1099 = vshrl.u32 %v1098, 7
    %v1100 = vsub.s32 0, %v1099
    %v1101 = vrot.slane %v1096, %v1100
    %v1102 = vlaneseq
    %v1103 = vshrl.u32 %v1102, 7
    %v1104 = vsub.s32 1, %v1103
    %v1105 = vrot.slane %v1096, %v1104
    %v1106 = vlaneseq
    %v1107 = vshrl.u32 %v1106, 7
    %v1108 = vsub.s32 2, %v1107
    %v1109 = vrot.slane %v1096, %v1108
    %v1110 = vlaneseq
    %v1111 = vshrl.u32 %v1110, 7
    %v1112 = vsub.s32 3, %v1111
    %v1113 = vrot.slane %v1096, %v1112
    %v1114 = vlaneseq
    %v1115 = vshrl.u32 %v1114, 7
    %v1116 = vsub.s32 4, %v1115
    %v1117 = vrot.slane %v1096, %v1116
    %v1118 = vlaneseq
    %v1119 = vshrl.u32 %v1118, 7
    %v1120 = vsub.s32 5, %v1119
    %v1121 = vrot.slane %v1096, %v1120
    %v1122 = vlaneseq
    %v1123 = vshrl.u32 %v1122, 7
    %v1124 = vsub.s32 6, %v1123
    %v1125 = vrot.slane %v1096, %v1124
    %v1126 = vlaneseq
    %v1127 = vshrl.u32 %v1126, 7
    %v1128 = vsub.s32 7, %v1127
    %v1129 = vrot.slane %v1096, %v1128
    %v1138 = vmul.f32 %v1006, %v1101
    %v1139 = vmul.f32 %v1008, %v1105
    %v1140 = vmul.f32 %v1010, %v1109
    %v1141 = vmul.f32 %v1012, %v1113
    %v1142 = vmul.f32 %v1014, %v1117
    %v1143 = vmul.f32 %v1016, %v1121
    %v1144 = vmul.f32 %v1018, %v1125
    %v1145 = vmul.f32 %v1020, %v1129
    %1147 = vset.pattern.permute.xlu0 0
    %1148 = vperm.xlu0 %1147, %v1138
    %v1149 = vpop.permute.xlu0 %1148
    %1152 = vset.pattern.permute.xlu0 0
    %1153 = vperm.xlu0 %1152, %v1139
    %v1154 = vpop.permute.xlu0 %1153
    %1157 = vset.pattern.permute.xlu0 0
    %1158 = vperm.xlu0 %1157, %v1140
    %v1159 = vpop.permute.xlu0 %1158
    %1162 = vset.pattern.permute.xlu0 0
    %1163 = vperm.xlu0 %1162, %v1141
    %v1164 = vpop.permute.xlu0 %1163
    %1167 = vset.pattern.permute.xlu0 0
    %1168 = vperm.xlu0 %1167, %v1142
    %v1169 = vpop.permute.xlu0 %1168
    %1172 = vset.pattern.permute.xlu0 0
    %1173 = vperm.xlu0 %1172, %v1143
    %v1174 = vpop.permute.xlu0 %1173
    %1177 = vset.pattern.permute.xlu0 0
    %1178 = vperm.xlu0 %1177, %v1144
    %v1179 = vpop.permute.xlu0 %1178
    %1182 = vset.pattern.permute.xlu0 0
    %1183 = vperm.xlu0 %1182, %v1145
    %v1184 = vpop.permute.xlu0 %1183
    %v1186 = vmul.f32 %v1149, %v128
    %v1187 = vmul.f32 %v1154, %v129
    %v1188 = vmul.f32 %v1159, %v130
    %v1189 = vmul.f32 %v1164, %v131
    %v1190 = vmul.f32 %v1169, %v132
    %v1191 = vmul.f32 %v1174, %v133
    %v1192 = vmul.f32 %v1179, %v134
    %v1193 = vmul.f32 %v1184, %v135
    %v1194 = vrot.slane %v1186, 4
    %v1195 = vadd.f32 %v1186, %v1194
    %v1196 = vrot.slane %v1195, 2
    %v1197 = vadd.f32 %v1195, %v1196
    %v1198 = vrot.slane %v1197, 1
    %v1199 = vadd.f32 %v1197, %v1198
    %v1200 = vrot.slane %v1187, 4
    %v1201 = vadd.f32 %v1187, %v1200
    %v1202 = vrot.slane %v1201, 2
    %v1203 = vadd.f32 %v1201, %v1202
    %v1204 = vrot.slane %v1203, 1
    %v1205 = vadd.f32 %v1203, %v1204
    %v1206 = vrot.slane %v1188, 4
    %v1207 = vadd.f32 %v1188, %v1206
    %v1208 = vrot.slane %v1207, 2
    %v1209 = vadd.f32 %v1207, %v1208
    %v1210 = vrot.slane %v1209, 1
    %v1211 = vadd.f32 %v1209, %v1210
    %v1212 = vrot.slane %v1189, 4
    %v1213 = vadd.f32 %v1189, %v1212
    %v1214 = vrot.slane %v1213, 2
    %v1215 = vadd.f32 %v1213, %v1214
    %v1216 = vrot.slane %v1215, 1
    %v1217 = vadd.f32 %v1215, %v1216
    %v1218 = vrot.slane %v1190, 4
    %v1219 = vadd.f32 %v1190, %v1218
    %v1220 = vrot.slane %v1219, 2
    %v1221 = vadd.f32 %v1219, %v1220
    %v1222 = vrot.slane %v1221, 1
    %v1223 = vadd.f32 %v1221, %v1222
    %v1224 = vrot.slane %v1191, 4
    %v1225 = vadd.f32 %v1191, %v1224
    %v1226 = vrot.slane %v1225, 2
    %v1227 = vadd.f32 %v1225, %v1226
    %v1228 = vrot.slane %v1227, 1
    %v1229 = vadd.f32 %v1227, %v1228
    %v1230 = vrot.slane %v1192, 4
    %v1231 = vadd.f32 %v1192, %v1230
    %v1232 = vrot.slane %v1231, 2
    %v1233 = vadd.f32 %v1231, %v1232
    %v1234 = vrot.slane %v1233, 1
    %v1235 = vadd.f32 %v1233, %v1234
    %v1236 = vrot.slane %v1193, 4
    %v1237 = vadd.f32 %v1193, %v1236
    %v1238 = vrot.slane %v1237, 2
    %v1239 = vadd.f32 %v1237, %v1238
    %v1240 = vrot.slane %v1239, 1
    %v1241 = vadd.f32 %v1239, %v1240
    %v1250 = vsel %vm937, %v1205, %v1199
    %v1251 = vsel %vm939, %v1211, %v1250
    %v1252 = vsel %vm941, %v1217, %v1251
    %v1253 = vsel %vm943, %v1223, %v1252
    %v1254 = vsel %vm945, %v1229, %v1253
    %v1255 = vsel %vm947, %v1235, %v1254
    %v1256 = vsel %vm949, %v1241, %v1255
    %v1259 = vlaneseq
    %v1260 = vshrl.u32 %v1259, 7
    %v1261 = vsub.s32 0, %v1260
    %v1262 = vrot.slane %v377, %v1261
    %1264 = vmatprep.subr.mxu0 0.0
    %1265 = vmatpush1.msra.mxu0 %v345
    %1266 = vmatprep.subr.mxu0 0.0
    %1267 = vmatpush1.msra.mxu0 %v346
    %1268 = vmatprep.subr.mxu0 0.0
    %1269 = vmatpush1.msra.mxu0 %v347
    %1270 = vmatprep.subr.mxu0 0.0
    %1271 = vmatpush1.msra.mxu0 %v348
    %1272 = vmatprep.subr.mxu0 0.0
    %1273 = vmatpush1.msra.mxu0 %v349
    %1274 = vmatprep.subr.mxu0 0.0
    %1275 = vmatpush1.msra.mxu0 %v350
    %1276 = vmatprep.subr.mxu0 0.0
    %1277 = vmatpush1.msra.mxu0 %v351
    %1278 = vmatprep.subr.mxu0 0.0
    %1279 = vmatpush1.msra.mxu0 %v352
    %1280 = vmatprep.subr.mxu0 0.0
    %1281 = vmatpush1.msra.mxu0 %v353
    %1282 = vmatprep.subr.mxu0 0.0
    %1283 = vmatpush1.msra.mxu0 %v354
    %1284 = vmatprep.subr.mxu0 0.0
    %1285 = vmatpush1.msra.mxu0 %v355
    %1286 = vmatprep.subr.mxu0 0.0
    %1287 = vmatpush1.msra.mxu0 %v356
    %1288 = vmatprep.subr.mxu0 0.0
    %1289 = vmatpush1.msra.mxu0 %v357
    %1290 = vmatprep.subr.mxu0 0.0
    %1291 = vmatpush1.msra.mxu0 %v358
    %1292 = vmatprep.subr.mxu0 0.0
    %1293 = vmatpush1.msra.mxu0 %v359
    %1294 = vmatprep.subr.mxu0 0.0
    %1295 = vmatpush1.msra.mxu0 %v360
    %1296 = vmatprep.subr.mxu0 0.0
    %1297 = vmatpush1.msra.mxu0 %v361
    %1298 = vmatprep.subr.mxu0 0.0
    %1299 = vmatpush1.msra.mxu0 %v362
    %1300 = vmatprep.subr.mxu0 0.0
    %1301 = vmatpush1.msra.mxu0 %v363
    %1302 = vmatprep.subr.mxu0 0.0
    %1303 = vmatpush1.msra.mxu0 %v364
    %1304 = vmatprep.subr.mxu0 0.0
    %1305 = vmatpush1.msra.mxu0 %v365
    %1306 = vmatprep.subr.mxu0 0.0
    %1307 = vmatpush1.msra.mxu0 %v366
    %1308 = vmatprep.subr.mxu0 0.0
    %1309 = vmatpush1.msra.mxu0 %v367
    %1310 = vmatprep.subr.mxu0 0.0
    %1311 = vmatpush1.msra.mxu0 %v368
    %1312 = vmatprep.subr.mxu0 0.0
    %1313 = vmatpush1.msra.mxu0 %v369
    %1314 = vmatprep.subr.mxu0 0.0
    %1315 = vmatpush1.msra.mxu0 %v370
    %1316 = vmatprep.subr.mxu0 0.0
    %1317 = vmatpush1.msra.mxu0 %v371
    %1318 = vmatprep.subr.mxu0 0.0
    %1319 = vmatpush1.msra.mxu0 %v372
    %1320 = vmatprep.subr.mxu0 0.0
    %1321 = vmatpush1.msra.mxu0 %v373
    %1322 = vmatprep.subr.mxu0 0.0
    %1323 = vmatpush1.msra.mxu0 %v374
    %1324 = vmatprep.subr.mxu0 0.0
    %1325 = vmatpush1.msra.mxu0 %v375
    %1326 = vmatprep.subr.mxu0 0.0
    %1327 = vmatpush1.msra.mxu0 %v376
    %1328 = vmatprep.mubr.f32.mxu0 %v1256
    %1329 = vmatmul.mubr.f32.gmra.mrb[0].mxu0 %v710
    %v1330 = vpop.f32.mrb[0].mxu0
    %v1331 = vadd.f32 %v1262, %v1330
    %v1332 = vpop.f32.mrb[0].mxu0
    %1333 = vdwg.mxu0
    %1334 = vmax.xlane.f32.xlu0 %v1331
    %v1335 = vpop.xlane.xlu0 %1334
    %v1336 = vsub.f32 %v1331, %v1335
    %v1337 = vmul.f32 %v1336, 1.442695
    %v1338 = vpow.pop %v1337
    %1339 = vadd.xlane.f32.xlu0 %v1338
    %v1340 = vpop.xlane.xlu0 %1339
    %v1341 = vlog2.pop %v1340
    %v1342 = vmul.f32 %v1341, 0.6931472
    %v1343 = vadd.f32 %v1335, %v1342
    %v1344 = vsub.f32 %v1331, %v1343
    %1345 = vst [vmem:[#allocation16] sm:$0xff] %v1344
    %1346 = vst [vmem:[#allocation17] sm:$0xff] %v1256
    %v1347 = vlaneseq
    %v1348 = vshrl.u32 %v1347, 7
    %v1349 = vsub.s32 %v904, %v1348
    %v1350 = vrot.slane %v1149, %v1349
    %v1351 = vlaneseq
    %v1352 = vshrl.u32 %v1351, 7
    %v1353 = vsub.s32 %v904, %v1352
    %v1354 = vrot.slane %v1154, %v1353
    %v1355 = vlaneseq
    %v1356 = vshrl.u32 %v1355, 7
    %v1357 = vsub.s32 %v904, %v1356
    %v1358 = vrot.slane %v1159, %v1357
    %v1359 = vlaneseq
    %v1360 = vshrl.u32 %v1359, 7
    %v1361 = vsub.s32 %v904, %v1360
    %v1362 = vrot.slane %v1164, %v1361
    %v1363 = vlaneseq
    %v1364 = vshrl.u32 %v1363, 7
    %v1365 = vsub.s32 %v904, %v1364
    %v1366 = vrot.slane %v1169, %v1365
    %v1367 = vlaneseq
    %v1368 = vshrl.u32 %v1367, 7
    %v1369 = vsub.s32 %v904, %v1368
    %v1370 = vrot.slane %v1174, %v1369
    %v1371 = vlaneseq
    %v1372 = vshrl.u32 %v1371, 7
    %v1373 = vsub.s32 %v904, %v1372
    %v1374 = vrot.slane %v1179, %v1373
    %v1375 = vlaneseq
    %v1376 = vshrl.u32 %v1375, 7
    %v1377 = vsub.s32 %v904, %v1376
    %v1378 = vrot.slane %v1184, %v1377
    %v1379 = vsel %vm937, %v1354, %v1350
    %v1380 = vsel %vm939, %v1358, %v1379
    %v1381 = vsel %vm941, %v1362, %v1380
    %v1382 = vsel %vm943, %v1366, %v1381
    %v1383 = vsel %vm945, %v1370, %v1382
    %v1384 = vsel %vm947, %v1374, %v1383
    %v1385 = vsel %vm949, %v1378, %v1384
    %1387 = vst.msk [vmem:[#allocation19] sm:$0xff] %vm952, %v1385
    %1388 = vst [vmem:[#allocation2] sm:$0xff] %v710
    %1389 = vst [vmem:[#allocation3] sm:$0xff] %v708
    %1390 = vst [vmem:[#allocation4] sm:$0xff] %v1256
    %1391 = vst [vmem:[#allocation20] sm:$0xff] %v710
    %s1392 = scalar_lea.vmem [#allocation20], 8
    %1393 = vst [vmem:[%s1392] sm:$0xff] %v708
    // Predicated region
    $region62: #{tpu_custom_call.1} parent=1 // pred_check
      _
    $region63: #{tpu_custom_call.1} parent=1 // pred_check_branch
      %1395 = sbr.rel (0) target = $region65
    $region64: #{tpu_custom_call.1} parent=1 // pred_region
      %s1397 = ssub.s32 128, 128
      %1398 = vsyncadd [#allocation7], %s1397
      %s1400 = sshll.u32 [#allocation16], 4
      %s1401 = int_to_ptr.vmem [resolvable:$true] %s1400
      %1403 = dma.vmem_to_hbm [thread:$0]  %s1401, 128, %s8, [#allocation7]
    $region65: #{tpu_custom_call.1} parent=1 // pred_fallthru
      _
    // Predicated region
    $region66: #{tpu_custom_call.1} parent=1 // pred_check
      _
    $region67: #{tpu_custom_call.1} parent=1 // pred_check_branch
      %1405 = sbr.rel (0) target = $region69
    $region68: #{tpu_custom_call.1} parent=1 // pred_region
      %s1407 = ssub.s32 128, 128
      %1408 = vsyncadd [#allocation18], %s1407
      %s1410 = sshll.u32 [#allocation17], 4
      %s1411 = int_to_ptr.vmem [resolvable:$true] %s1410
      %1413 = dma.vmem_to_hbm [thread:$0]  %s1411, 128, %s9, [#allocation18]
    $region69: #{tpu_custom_call.1} parent=1 // pred_fallthru
      _
    // Predicated region
    $region70: #{tpu_custom_call.1} parent=1 // pred_check
      _
    $region71: #{tpu_custom_call.1} parent=1 // pred_check_branch
      %1415 = sbr.rel (0) target = $region73
    $region72: #{tpu_custom_call.1} parent=1 // pred_region
      %s1417 = ssub.s32 128, 128
      %1418 = vsyncadd [#allocation18], %s1417
      %s1420 = sshll.u32 [#allocation19], 4
      %s1421 = int_to_ptr.vmem [resolvable:$true] %s1420
      %1423 = dma.vmem_to_hbm [thread:$0]  %s1421, 128, %s10, [#allocation18]
    $region73: #{tpu_custom_call.1} parent=1 // pred_fallthru
      _
    // Predicated region
    $region74: #{tpu_custom_call.1} parent=1 // pred_check
      _
    $region75: #{tpu_custom_call.1} parent=1 // pred_check_branch
      %1425 = sbr.rel (0) target = $region77
    $region76: #{tpu_custom_call.1} parent=1 // pred_region
      %s1427 = ssub.s32 256, 256
      %1428 = vsyncadd [#allocation21], %s1427
      %s1429 = sshll.u32 [#allocation20], 4
      %s1430 = int_to_ptr.vmem [resolvable:$true] %s1429
      %1435 = dma.vmem_to_hbm [thread:$0]  %s1430, 256, %s11, [#allocation21], 128, 128, 8
    $region77: #{tpu_custom_call.1} parent=1 // pred_fallthru
      _
    // Predicated region
    $region78: #{tpu_custom_call.1} parent=1 // pred_check
      _
    $region79: #{tpu_custom_call.1} parent=1 // pred_check_branch
      %1437 = sbr.rel (0) target = $region81
    $region80: #{tpu_custom_call.1} parent=1 // pred_region
      %1438 = dma.done [#allocation7], 128
    $region81: #{tpu_custom_call.1} parent=1 // pred_fallthru
      _
    // Predicated region
    $region82: #{tpu_custom_call.1} parent=1 // pred_check
      _
    $region83: #{tpu_custom_call.1} parent=1 // pred_check_branch
      %1440 = sbr.rel (0) target = $region85
    $region84: #{tpu_custom_call.1} parent=1 // pred_region
      %1441 = dma.done [#allocation18], 128
    $region85: #{tpu_custom_call.1} parent=1 // pred_fallthru
      _
    // Predicated region
    $region86: #{tpu_custom_call.1} parent=1 // pred_check
      _
    $region87: #{tpu_custom_call.1} parent=1 // pred_check_branch
      %1443 = sbr.rel (0) target = $region89
    $region88: #{tpu_custom_call.1} parent=1 // pred_region
      %1444 = dma.done [#allocation18], 128
    $region89: #{tpu_custom_call.1} parent=1 // pred_fallthru
      _
    // Predicated region
    $region90: #{tpu_custom_call.1} parent=1 // pred_check
      _
    $region91: #{tpu_custom_call.1} parent=1 // pred_check_branch
      %1446 = sbr.rel (0) target = $region93
    $region92: #{tpu_custom_call.1} parent=1 // pred_region
      %1447 = dma.done [#allocation21], 256
    $region93: #{tpu_custom_call.1} parent=1 // pred_fallthru
      _
    %1448 = vsyncpa [#allocation6], 1
    %1449 = vsyncpa [#allocation9], 1
    %1450 = vsyncpa [#allocation12], 1
    %1451 = vsyncpa [#allocation15], 1
    %1452 = vsyncpa [#allocation7], 1
    %1453 = vsyncpa [#allocation18], 1
    %1454 = vsyncpa [#allocation21], 1

</llo_original>
